<compile_context>
chip_gen: v6e
topology: v6e:2x2x1
jax: 0.10.0
libtpu: 0.0.40
codegen_flags: <defaults>
</compile_context>

<pallas_src>
import functools

import jax
import jax.numpy as jnp
from jax.experimental import pallas as pl
from jax.experimental.pallas import tpu as pltpu

LANES = 128


def _round_up(a, m):
    return ((a + m - 1) // m) * m


def _choose_tiling(rows, tile_rows):
    """Pick (tile, n_tiles, rows_padded) for the 1-D batch-tile grid.

    * Small batches pad to at most one (8,128) tile (not a full default tile).
    * >= 2 parallel tiles whenever there is enough work, so the "parallel"
      grid axis can shard across v7x's two TensorCores.
    * Tiles are balanced (round_up(cdiv(rows, n_tiles), 8)) so large batches
      never almost-double their padding just to hit the requested tile size.
    """
    rows8 = _round_up(max(rows, 1), 8)
    tile = min(_round_up(tile_rows, 8), rows8)
    n_tiles = pl.cdiv(rows8, tile)
    if n_tiles == 1 and rows8 >= 16:
        n_tiles = 2                       # v7x dual-TC occupancy
    tile = _round_up(pl.cdiv(rows8, n_tiles), 8)
    n_tiles = pl.cdiv(rows8, tile)
    return tile, n_tiles, n_tiles * tile


def _rnvp_kernel(x1_ref, x2_ref, p_ref, z2_ref, logpz_ref, logjac_ref,
                 *, hidden, compute_dtype):
    """One (TILE, 128) lane-dense batch slab.

    p_ref is a single (8, hidden) f32 SMEM array:
      row 0: sig Linear(1,H).weight    row 4: mu Linear(1,H).weight
      row 1: sig Linear(1,H).bias      row 5: mu Linear(1,H).bias
      row 2: sig Linear(H,1).weight    row 6: mu Linear(H,1).weight
      row 3: sig Linear(H,1).bias @[0] row 7: mu Linear(H,1).bias @[0]
    """
    x1 = x1_ref[...]                                  # (TILE, 128) f32
    x1c = x1 if compute_dtype == jnp.float32 else x1.astype(compute_dtype)

    # Unrolled H-loop: each step is a handful of VPU ops with scalar operands
    # read straight from SMEM (no vector weight broadcasts inside the loop).
    # sig / mu always accumulate in f32.
    sig = jnp.full_like(x1, p_ref[3, 0])
    mu = jnp.full_like(x1, p_ref[7, 0])
    for j in range(hidden):
        hs = x1c * p_ref[0, j].astype(compute_dtype) + p_ref[1, j].astype(compute_dtype)
        hs = jnp.maximum(hs, 0.01 * hs)               # LeakyReLU (slope 0.01)
        sig = sig + hs.astype(jnp.float32) * p_ref[2, j]

        hm = x1c * p_ref[4, j].astype(compute_dtype) + p_ref[5, j].astype(compute_dtype)
        hm = jnp.maximum(hm, 0.01 * hm)
        mu = mu + hm.astype(jnp.float32) * p_ref[6, j]

    # x2 load sunk below the unrolled chain: shorter live range, lets the
    # scheduler overlap this vld with the tail of the VALU chain.
    x2 = x2_ref[...]

    # Affine coupling: z1 = x1 (identity, not written back), z2 = x2*exp(sig)+mu
    z2 = x2 * jnp.exp(sig) + mu

    z2_ref[...] = z2
    # 2-D standard normal log prob: -log(2*pi) - 0.5 * ||z||^2
    logpz_ref[...] = -jnp.log(2.0 * jnp.pi) - 0.5 * (x1 * x1 + z2 * z2)
    logjac_ref[...] = sig                             # log|det J| = sig


def pack_params(params):
    """Pack the 8 tiny weight arrays into one (8, hidden) f32 SMEM operand."""
    w1s, b1s, w2s, b2s, w1m, b1m, w2m, b2m = params
    hidden = w1s.shape[0]

    def row(v):
        v = jnp.asarray(v, jnp.float32).reshape(-1)
        return jnp.pad(v, (0, hidden - v.shape[0]))

    return jnp.stack([row(w1s), row(b1s), row(w2s), row(b2s),
                      row(w1m), row(b1m), row(w2m), row(b2m)], axis=0)


def rnvp_forward_packed(x1p, x2p, packed_params, *, tile_rows=2048,
                        compute_dtype=jnp.float32):
    """Lane-dense entry point: x1p / x2p are (rows, 128) f32 slabs holding the
    batch along sublanes+lanes; returns (z2p, log_pz_p, log_jacob_p) slabs of
    the same shape.  Prefer this end-to-end to avoid the (N,2) de-interleave /
    re-stack HBM passes of `rnvp_forward`."""
    rows, lanes = x1p.shape
    assert lanes == LANES and x2p.shape == (rows, LANES)
    hidden = packed_params.shape[1]

    tile, n_tiles, rows_padded = _choose_tiling(rows, tile_rows)
    if rows_padded != rows:
        pad = ((0, rows_padded - rows), (0, 0))
        x1p = jnp.pad(x1p, pad)
        x2p = jnp.pad(x2p, pad)
    # Padded slots compute on x1 = x2 = 0 -> sig/mu are finite constants, so
    # no NaNs leak into the (discarded) padded outputs.

    tile_spec = pl.BlockSpec((tile, LANES), lambda i: (i, 0))
    smem_spec = pl.BlockSpec(memory_space=pltpu.MemorySpace.SMEM)
    slab = jax.ShapeDtypeStruct((rows_padded, LANES), jnp.float32)

    kernel = functools.partial(_rnvp_kernel, hidden=hidden,
                               compute_dtype=compute_dtype)

    z2p, logpzp, logjacp = pl.pallas_call(
        kernel,
        out_shape=(slab, slab, slab),
        grid=(n_tiles,),
        in_specs=[tile_spec, tile_spec, smem_spec],
        out_specs=(tile_spec, tile_spec, tile_spec),
        compiler_params=pltpu.CompilerParams(
            dimension_semantics=("parallel",)),
    )(x1p, x2p, packed_params)

    if rows_padded != rows:
        z2p, logpzp, logjacp = z2p[:rows], logpzp[:rows], logjacp[:rows]
    return z2p, logpzp, logjacp


def rnvp_forward(x, params, *, tile_rows=2048, compute_dtype=jnp.float32):
    """(N, 2) drop-in forward matching the PyTorch module.
    Returns (z_hat (N, 2), log_pz (N,), log_jacob (N,))."""
    N = x.shape[0]
    packed = pack_params(params)

    rows = pl.cdiv(N, LANES)
    _, _, rows_padded = _choose_tiling(rows, tile_rows)
    n_pad = rows_padded * LANES

    x1 = x[:, 0]
    x2 = x[:, 1]
    x1p = jnp.pad(x1, (0, n_pad - N)).reshape(rows_padded, LANES)
    x2p = jnp.pad(x2, (0, n_pad - N)).reshape(rows_padded, LANES)

    z2p, logpzp, logjacp = rnvp_forward_packed(
        x1p, x2p, packed, tile_rows=tile_rows, compute_dtype=compute_dtype)

    z2 = z2p.reshape(-1)[:N]
    log_pz = logpzp.reshape(-1)[:N]
    log_jacob = logjacp.reshape(-1)[:N]
    z_hat = jnp.stack([x1, z2], axis=-1)      # z1 is the identity copy of x1
    return z_hat, log_pz, log_jacob


def init_params(key, hidden):
    """Synthetic params matching nn.Linear(1,H) / nn.Linear(H,1) shapes (flattened)."""
    ks = jax.random.split(key, 8)
    scale = 0.5
    w1s = scale * jax.random.normal(ks[0], (hidden,), jnp.float32)  # Linear(1,H).weight
    b1s = scale * jax.random.normal(ks[1], (hidden,), jnp.float32)  # Linear(1,H).bias
    w2s = scale * jax.random.normal(ks[2], (hidden,), jnp.float32)  # Linear(H,1).weight
    b2s = scale * jax.random.normal(ks[3], (1,), jnp.float32)       # Linear(H,1).bias
    w1m = scale * jax.random.normal(ks[4], (hidden,), jnp.float32)
    b1m = scale * jax.random.normal(ks[5], (hidden,), jnp.float32)
    w2m = scale * jax.random.normal(ks[6], (hidden,), jnp.float32)
    b2m = scale * jax.random.normal(ks[7], (1,), jnp.float32)
    return (w1s, b1s, w2s, b2s, w1m, b1m, w2m, b2m)


def rnvp_reference(x, params):
    """Pure-JAX reference of the PyTorch forward for a sanity check."""
    w1s, b1s, w2s, b2s, w1m, b1m, w2m, b2m = params
    x1, x2 = x[:, :1], x[:, 1:]

    def mlp(v, w1, b1, w2, b2):
        h = v @ w1[None, :] + b1[None, :]              # (N, H)
        h = jnp.where(h > 0, h, 0.01 * h)              # LeakyReLU
        return h @ w2[:, None] + b2[None, :]           # (N, 1)

    sig = mlp(x1, w1s, b1s, w2s, b2s)
    mu = mlp(x1, w1m, b1m, w2m, b2m)
    z2 = x2 * jnp.exp(sig) + mu
    z_hat = jnp.concatenate([x1, z2], axis=-1)
    log_pz = -jnp.log(2.0 * jnp.pi) - 0.5 * jnp.sum(z_hat * z_hat, axis=-1)
    log_jacob = jnp.sum(sig, axis=-1)
    return z_hat, log_pz, log_jacob


if __name__ == "__main__":
    HIDDEN = 32
    key = jax.random.PRNGKey(0)
    k_x, k_p, k_x2 = jax.random.split(key, 3)
    params = init_params(k_p, HIDDEN)

    # Small batch: clamped tiling pads N=300 to a single (8,128) tile.
    x_small = jax.random.normal(k_x, (300, 2), jnp.float32)
    z_hat, log_pz, log_jacob = jax.block_until_ready(
        rnvp_forward(x_small, params))
    z_ref, pz_ref, jac_ref = rnvp_reference(x_small, params)
    assert jnp.allclose(z_hat, z_ref, atol=1e-5, rtol=1e-5)
    assert jnp.allclose(log_pz, pz_ref, atol=1e-5, rtol=1e-5)
    assert jnp.allclose(log_jacob, jac_ref, atol=1e-5, rtol=1e-5)

    # Larger batch (matches the module's 3000-sample base draw): exercises the
    # balanced >= 2-tile "parallel" grid path.
    x_big = jax.random.normal(k_x2, (3000, 2), jnp.float32)
    z_hat2, log_pz2, log_jacob2 = jax.block_until_ready(
        rnvp_forward(x_big, params))
    z_ref2, pz_ref2, jac_ref2 = rnvp_reference(x_big, params)
    assert jnp.allclose(z_hat2, z_ref2, atol=1e-5, rtol=1e-5)
    assert jnp.allclose(log_pz2, pz_ref2, atol=1e-5, rtol=1e-5)
    assert jnp.allclose(log_jacob2, jac_ref2, atol=1e-5, rtol=1e-5)

    print("KERNEL_OK")
</pallas_src>

<mosaic_0001>
module attributes {stable_mosaic.version = 11 : i64} {
  func.func @_rnvp_kernel(%arg0: i32, %arg1: memref<8x128xf32, #tpu.memory_space<vmem>>, %arg2: memref<8x128xf32, #tpu.memory_space<vmem>>, %arg3: memref<8x32xf32, #tpu.memory_space<smem>>, %arg4: memref<8x128xf32, #tpu.memory_space<vmem>>, %arg5: memref<8x128xf32, #tpu.memory_space<vmem>>, %arg6: memref<8x128xf32, #tpu.memory_space<vmem>>) attributes {dimension_semantics = [#tpu.dimension_semantics<parallel>], iteration_bounds = array<i64: 1>, scalar_prefetch = 0 : i64, scratch_operands = 0 : i64, tpu.core_type = #tpu.core_type<tc>, window_params = [{transform_indices = @transform_0, window_bounds = array<i64: 8, 128>}, {transform_indices = @transform_1, window_bounds = array<i64: 8, 128>}, {transform_indices = @transform_2, window_bounds = array<i64: 8, 32>}, {transform_indices = @transform_3, window_bounds = array<i64: 8, 128>}, {transform_indices = @transform_4, window_bounds = array<i64: 8, 128>}, {transform_indices = @transform_5, window_bounds = array<i64: 8, 128>}]} {
    %c0 = arith.constant 0 : index
    %c0_0 = arith.constant 0 : index
    %0 = vector.load %arg1[%c0, %c0_0] : memref<8x128xf32, #tpu.memory_space<vmem>>, vector<8x128xf32>
    %c3 = arith.constant 3 : index
    %c0_1 = arith.constant 0 : index
    %1 = memref.load %arg3[%c3, %c0_1] : memref<8x32xf32, #tpu.memory_space<smem>>
    %2 = vector.broadcast %1 : f32 to vector<8x128xf32>
    %c7 = arith.constant 7 : index
    %c0_2 = arith.constant 0 : index
    %3 = memref.load %arg3[%c7, %c0_2] : memref<8x32xf32, #tpu.memory_space<smem>>
    %4 = vector.broadcast %3 : f32 to vector<8x128xf32>
    %c0_3 = arith.constant 0 : index
    %c0_4 = arith.constant 0 : index
    %5 = memref.load %arg3[%c0_3, %c0_4] : memref<8x32xf32, #tpu.memory_space<smem>>
    %6 = vector.broadcast %5 : f32 to vector<8x128xf32>
    %7 = arith.mulf %0, %6 : vector<8x128xf32>
    %c1 = arith.constant 1 : index
    %c0_5 = arith.constant 0 : index
    %8 = memref.load %arg3[%c1, %c0_5] : memref<8x32xf32, #tpu.memory_space<smem>>
    %9 = vector.broadcast %8 : f32 to vector<8x128xf32>
    %10 = arith.addf %7, %9 : vector<8x128xf32>
    %cst = arith.constant 0.00999999977 : f32
    %11 = vector.broadcast %cst : f32 to vector<8x128xf32>
    %12 = arith.mulf %11, %10 : vector<8x128xf32>
    %13 = arith.maximumf %10, %12 : vector<8x128xf32>
    %c2 = arith.constant 2 : index
    %c0_6 = arith.constant 0 : index
    %14 = memref.load %arg3[%c2, %c0_6] : memref<8x32xf32, #tpu.memory_space<smem>>
    %15 = vector.broadcast %14 : f32 to vector<8x128xf32>
    %16 = arith.mulf %13, %15 : vector<8x128xf32>
    %17 = arith.addf %2, %16 : vector<8x128xf32>
    %c4 = arith.constant 4 : index
    %c0_7 = arith.constant 0 : index
    %18 = memref.load %arg3[%c4, %c0_7] : memref<8x32xf32, #tpu.memory_space<smem>>
    %19 = vector.broadcast %18 : f32 to vector<8x128xf32>
    %20 = arith.mulf %0, %19 : vector<8x128xf32>
    %c5 = arith.constant 5 : index
    %c0_8 = arith.constant 0 : index
    %21 = memref.load %arg3[%c5, %c0_8] : memref<8x32xf32, #tpu.memory_space<smem>>
    %22 = vector.broadcast %21 : f32 to vector<8x128xf32>
    %23 = arith.addf %20, %22 : vector<8x128xf32>
    %cst_9 = arith.constant 0.00999999977 : f32
    %24 = vector.broadcast %cst_9 : f32 to vector<8x128xf32>
    %25 = arith.mulf %24, %23 : vector<8x128xf32>
    %26 = arith.maximumf %23, %25 : vector<8x128xf32>
    %c6 = arith.constant 6 : index
    %c0_10 = arith.constant 0 : index
    %27 = memref.load %arg3[%c6, %c0_10] : memref<8x32xf32, #tpu.memory_space<smem>>
    %28 = vector.broadcast %27 : f32 to vector<8x128xf32>
    %29 = arith.mulf %26, %28 : vector<8x128xf32>
    %30 = arith.addf %4, %29 : vector<8x128xf32>
    %c0_11 = arith.constant 0 : index
    %c1_12 = arith.constant 1 : index
    %31 = memref.load %arg3[%c0_11, %c1_12] : memref<8x32xf32, #tpu.memory_space<smem>>
    %32 = vector.broadcast %31 : f32 to vector<8x128xf32>
    %33 = arith.mulf %0, %32 : vector<8x128xf32>
    %c1_13 = arith.constant 1 : index
    %c1_14 = arith.constant 1 : index
    %34 = memref.load %arg3[%c1_13, %c1_14] : memref<8x32xf32, #tpu.memory_space<smem>>
    %35 = vector.broadcast %34 : f32 to vector<8x128xf32>
    %36 = arith.addf %33, %35 : vector<8x128xf32>
    %cst_15 = arith.constant 0.00999999977 : f32
    %37 = vector.broadcast %cst_15 : f32 to vector<8x128xf32>
    %38 = arith.mulf %37, %36 : vector<8x128xf32>
    %39 = arith.maximumf %36, %38 : vector<8x128xf32>
    %c2_16 = arith.constant 2 : index
    %c1_17 = arith.constant 1 : index
    %40 = memref.load %arg3[%c2_16, %c1_17] : memref<8x32xf32, #tpu.memory_space<smem>>
    %41 = vector.broadcast %40 : f32 to vector<8x128xf32>
    %42 = arith.mulf %39, %41 : vector<8x128xf32>
    %43 = arith.addf %17, %42 : vector<8x128xf32>
    %c4_18 = arith.constant 4 : index
    %c1_19 = arith.constant 1 : index
    %44 = memref.load %arg3[%c4_18, %c1_19] : memref<8x32xf32, #tpu.memory_space<smem>>
    %45 = vector.broadcast %44 : f32 to vector<8x128xf32>
    %46 = arith.mulf %0, %45 : vector<8x128xf32>
    %c5_20 = arith.constant 5 : index
    %c1_21 = arith.constant 1 : index
    %47 = memref.load %arg3[%c5_20, %c1_21] : memref<8x32xf32, #tpu.memory_space<smem>>
    %48 = vector.broadcast %47 : f32 to vector<8x128xf32>
    %49 = arith.addf %46, %48 : vector<8x128xf32>
    %cst_22 = arith.constant 0.00999999977 : f32
    %50 = vector.broadcast %cst_22 : f32 to vector<8x128xf32>
    %51 = arith.mulf %50, %49 : vector<8x128xf32>
    %52 = arith.maximumf %49, %51 : vector<8x128xf32>
    %c6_23 = arith.constant 6 : index
    %c1_24 = arith.constant 1 : index
    %53 = memref.load %arg3[%c6_23, %c1_24] : memref<8x32xf32, #tpu.memory_space<smem>>
    %54 = vector.broadcast %53 : f32 to vector<8x128xf32>
    %55 = arith.mulf %52, %54 : vector<8x128xf32>
    %56 = arith.addf %30, %55 : vector<8x128xf32>
    %c0_25 = arith.constant 0 : index
    %c2_26 = arith.constant 2 : index
    %57 = memref.load %arg3[%c0_25, %c2_26] : memref<8x32xf32, #tpu.memory_space<smem>>
    %58 = vector.broadcast %57 : f32 to vector<8x128xf32>
    %59 = arith.mulf %0, %58 : vector<8x128xf32>
    %c1_27 = arith.constant 1 : index
    %c2_28 = arith.constant 2 : index
    %60 = memref.load %arg3[%c1_27, %c2_28] : memref<8x32xf32, #tpu.memory_space<smem>>
    %61 = vector.broadcast %60 : f32 to vector<8x128xf32>
    %62 = arith.addf %59, %61 : vector<8x128xf32>
    %cst_29 = arith.constant 0.00999999977 : f32
    %63 = vector.broadcast %cst_29 : f32 to vector<8x128xf32>
    %64 = arith.mulf %63, %62 : vector<8x128xf32>
    %65 = arith.maximumf %62, %64 : vector<8x128xf32>
    %c2_30 = arith.constant 2 : index
    %c2_31 = arith.constant 2 : index
    %66 = memref.load %arg3[%c2_30, %c2_31] : memref<8x32xf32, #tpu.memory_space<smem>>
    %67 = vector.broadcast %66 : f32 to vector<8x128xf32>
    %68 = arith.mulf %65, %67 : vector<8x128xf32>
    %69 = arith.addf %43, %68 : vector<8x128xf32>
    %c4_32 = arith.constant 4 : index
    %c2_33 = arith.constant 2 : index
    %70 = memref.load %arg3[%c4_32, %c2_33] : memref<8x32xf32, #tpu.memory_space<smem>>
    %71 = vector.broadcast %70 : f32 to vector<8x128xf32>
    %72 = arith.mulf %0, %71 : vector<8x128xf32>
    %c5_34 = arith.constant 5 : index
    %c2_35 = arith.constant 2 : index
    %73 = memref.load %arg3[%c5_34, %c2_35] : memref<8x32xf32, #tpu.memory_space<smem>>
    %74 = vector.broadcast %73 : f32 to vector<8x128xf32>
    %75 = arith.addf %72, %74 : vector<8x128xf32>
    %cst_36 = arith.constant 0.00999999977 : f32
    %76 = vector.broadcast %cst_36 : f32 to vector<8x128xf32>
    %77 = arith.mulf %76, %75 : vector<8x128xf32>
    %78 = arith.maximumf %75, %77 : vector<8x128xf32>
    %c6_37 = arith.constant 6 : index
    %c2_38 = arith.constant 2 : index
    %79 = memref.load %arg3[%c6_37, %c2_38] : memref<8x32xf32, #tpu.memory_space<smem>>
    %80 = vector.broadcast %79 : f32 to vector<8x128xf32>
    %81 = arith.mulf %78, %80 : vector<8x128xf32>
    %82 = arith.addf %56, %81 : vector<8x128xf32>
    %c0_39 = arith.constant 0 : index
    %c3_40 = arith.constant 3 : index
    %83 = memref.load %arg3[%c0_39, %c3_40] : memref<8x32xf32, #tpu.memory_space<smem>>
    %84 = vector.broadcast %83 : f32 to vector<8x128xf32>
    %85 = arith.mulf %0, %84 : vector<8x128xf32>
    %c1_41 = arith.constant 1 : index
    %c3_42 = arith.constant 3 : index
    %86 = memref.load %arg3[%c1_41, %c3_42] : memref<8x32xf32, #tpu.memory_space<smem>>
    %87 = vector.broadcast %86 : f32 to vector<8x128xf32>
    %88 = arith.addf %85, %87 : vector<8x128xf32>
    %cst_43 = arith.constant 0.00999999977 : f32
    %89 = vector.broadcast %cst_43 : f32 to vector<8x128xf32>
    %90 = arith.mulf %89, %88 : vector<8x128xf32>
    %91 = arith.maximumf %88, %90 : vector<8x128xf32>
    %c2_44 = arith.constant 2 : index
    %c3_45 = arith.constant 3 : index
    %92 = memref.load %arg3[%c2_44, %c3_45] : memref<8x32xf32, #tpu.memory_space<smem>>
    %93 = vector.broadcast %92 : f32 to vector<8x128xf32>
    %94 = arith.mulf %91, %93 : vector<8x128xf32>
    %95 = arith.addf %69, %94 : vector<8x128xf32>
    %c4_46 = arith.constant 4 : index
    %c3_47 = arith.constant 3 : index
    %96 = memref.load %arg3[%c4_46, %c3_47] : memref<8x32xf32, #tpu.memory_space<smem>>
    %97 = vector.broadcast %96 : f32 to vector<8x128xf32>
    %98 = arith.mulf %0, %97 : vector<8x128xf32>
    %c5_48 = arith.constant 5 : index
    %c3_49 = arith.constant 3 : index
    %99 = memref.load %arg3[%c5_48, %c3_49] : memref<8x32xf32, #tpu.memory_space<smem>>
    %100 = vector.broadcast %99 : f32 to vector<8x128xf32>
    %101 = arith.addf %98, %100 : vector<8x128xf32>
    %cst_50 = arith.constant 0.00999999977 : f32
    %102 = vector.broadcast %cst_50 : f32 to vector<8x128xf32>
    %103 = arith.mulf %102, %101 : vector<8x128xf32>
    %104 = arith.maximumf %101, %103 : vector<8x128xf32>
    %c6_51 = arith.constant 6 : index
    %c3_52 = arith.constant 3 : index
    %105 = memref.load %arg3[%c6_51, %c3_52] : memref<8x32xf32, #tpu.memory_space<smem>>
    %106 = vector.broadcast %105 : f32 to vector<8x128xf32>
    %107 = arith.mulf %104, %106 : vector<8x128xf32>
    %108 = arith.addf %82, %107 : vector<8x128xf32>
    %c0_53 = arith.constant 0 : index
    %c4_54 = arith.constant 4 : index
    %109 = memref.load %arg3[%c0_53, %c4_54] : memref<8x32xf32, #tpu.memory_space<smem>>
    %110 = vector.broadcast %109 : f32 to vector<8x128xf32>
    %111 = arith.mulf %0, %110 : vector<8x128xf32>
    %c1_55 = arith.constant 1 : index
    %c4_56 = arith.constant 4 : index
    %112 = memref.load %arg3[%c1_55, %c4_56] : memref<8x32xf32, #tpu.memory_space<smem>>
    %113 = vector.broadcast %112 : f32 to vector<8x128xf32>
    %114 = arith.addf %111, %113 : vector<8x128xf32>
    %cst_57 = arith.constant 0.00999999977 : f32
    %115 = vector.broadcast %cst_57 : f32 to vector<8x128xf32>
    %116 = arith.mulf %115, %114 : vector<8x128xf32>
    %117 = arith.maximumf %114, %116 : vector<8x128xf32>
    %c2_58 = arith.constant 2 : index
    %c4_59 = arith.constant 4 : index
    %118 = memref.load %arg3[%c2_58, %c4_59] : memref<8x32xf32, #tpu.memory_space<smem>>
    %119 = vector.broadcast %118 : f32 to vector<8x128xf32>
    %120 = arith.mulf %117, %119 : vector<8x128xf32>
    %121 = arith.addf %95, %120 : vector<8x128xf32>
    %c4_60 = arith.constant 4 : index
    %c4_61 = arith.constant 4 : index
    %122 = memref.load %arg3[%c4_60, %c4_61] : memref<8x32xf32, #tpu.memory_space<smem>>
    %123 = vector.broadcast %122 : f32 to vector<8x128xf32>
    %124 = arith.mulf %0, %123 : vector<8x128xf32>
    %c5_62 = arith.constant 5 : index
    %c4_63 = arith.constant 4 : index
    %125 = memref.load %arg3[%c5_62, %c4_63] : memref<8x32xf32, #tpu.memory_space<smem>>
    %126 = vector.broadcast %125 : f32 to vector<8x128xf32>
    %127 = arith.addf %124, %126 : vector<8x128xf32>
    %cst_64 = arith.constant 0.00999999977 : f32
    %128 = vector.broadcast %cst_64 : f32 to vector<8x128xf32>
    %129 = arith.mulf %128, %127 : vector<8x128xf32>
    %130 = arith.maximumf %127, %129 : vector<8x128xf32>
    %c6_65 = arith.constant 6 : index
    %c4_66 = arith.constant 4 : index
    %131 = memref.load %arg3[%c6_65, %c4_66] : memref<8x32xf32, #tpu.memory_space<smem>>
    %132 = vector.broadcast %131 : f32 to vector<8x128xf32>
    %133 = arith.mulf %130, %132 : vector<8x128xf32>
    %134 = arith.addf %108, %133 : vector<8x128xf32>
    %c0_67 = arith.constant 0 : index
    %c5_68 = arith.constant 5 : index
    %135 = memref.load %arg3[%c0_67, %c5_68] : memref<8x32xf32, #tpu.memory_space<smem>>
    %136 = vector.broadcast %135 : f32 to vector<8x128xf32>
    %137 = arith.mulf %0, %136 : vector<8x128xf32>
    %c1_69 = arith.constant 1 : index
    %c5_70 = arith.constant 5 : index
    %138 = memref.load %arg3[%c1_69, %c5_70] : memref<8x32xf32, #tpu.memory_space<smem>>
    %139 = vector.broadcast %138 : f32 to vector<8x128xf32>
    %140 = arith.addf %137, %139 : vector<8x128xf32>
    %cst_71 = arith.constant 0.00999999977 : f32
    %141 = vector.broadcast %cst_71 : f32 to vector<8x128xf32>
    %142 = arith.mulf %141, %140 : vector<8x128xf32>
    %143 = arith.maximumf %140, %142 : vector<8x128xf32>
    %c2_72 = arith.constant 2 : index
    %c5_73 = arith.constant 5 : index
    %144 = memref.load %arg3[%c2_72, %c5_73] : memref<8x32xf32, #tpu.memory_space<smem>>
    %145 = vector.broadcast %144 : f32 to vector<8x128xf32>
    %146 = arith.mulf %143, %145 : vector<8x128xf32>
    %147 = arith.addf %121, %146 : vector<8x128xf32>
    %c4_74 = arith.constant 4 : index
    %c5_75 = arith.constant 5 : index
    %148 = memref.load %arg3[%c4_74, %c5_75] : memref<8x32xf32, #tpu.memory_space<smem>>
    %149 = vector.broadcast %148 : f32 to vector<8x128xf32>
    %150 = arith.mulf %0, %149 : vector<8x128xf32>
    %c5_76 = arith.constant 5 : index
    %c5_77 = arith.constant 5 : index
    %151 = memref.load %arg3[%c5_76, %c5_77] : memref<8x32xf32, #tpu.memory_space<smem>>
    %152 = vector.broadcast %151 : f32 to vector<8x128xf32>
    %153 = arith.addf %150, %152 : vector<8x128xf32>
    %cst_78 = arith.constant 0.00999999977 : f32
    %154 = vector.broadcast %cst_78 : f32 to vector<8x128xf32>
    %155 = arith.mulf %154, %153 : vector<8x128xf32>
    %156 = arith.maximumf %153, %155 : vector<8x128xf32>
    %c6_79 = arith.constant 6 : index
    %c5_80 = arith.constant 5 : index
    %157 = memref.load %arg3[%c6_79, %c5_80] : memref<8x32xf32, #tpu.memory_space<smem>>
    %158 = vector.broadcast %157 : f32 to vector<8x128xf32>
    %159 = arith.mulf %156, %158 : vector<8x128xf32>
    %160 = arith.addf %134, %159 : vector<8x128xf32>
    %c0_81 = arith.constant 0 : index
    %c6_82 = arith.constant 6 : index
    %161 = memref.load %arg3[%c0_81, %c6_82] : memref<8x32xf32, #tpu.memory_space<smem>>
    %162 = vector.broadcast %161 : f32 to vector<8x128xf32>
    %163 = arith.mulf %0, %162 : vector<8x128xf32>
    %c1_83 = arith.constant 1 : index
    %c6_84 = arith.constant 6 : index
    %164 = memref.load %arg3[%c1_83, %c6_84] : memref<8x32xf32, #tpu.memory_space<smem>>
    %165 = vector.broadcast %164 : f32 to vector<8x128xf32>
    %166 = arith.addf %163, %165 : vector<8x128xf32>
    %cst_85 = arith.constant 0.00999999977 : f32
    %167 = vector.broadcast %cst_85 : f32 to vector<8x128xf32>
    %168 = arith.mulf %167, %166 : vector<8x128xf32>
    %169 = arith.maximumf %166, %168 : vector<8x128xf32>
    %c2_86 = arith.constant 2 : index
    %c6_87 = arith.constant 6 : index
    %170 = memref.load %arg3[%c2_86, %c6_87] : memref<8x32xf32, #tpu.memory_space<smem>>
    %171 = vector.broadcast %170 : f32 to vector<8x128xf32>
    %172 = arith.mulf %169, %171 : vector<8x128xf32>
    %173 = arith.addf %147, %172 : vector<8x128xf32>
    %c4_88 = arith.constant 4 : index
    %c6_89 = arith.constant 6 : index
    %174 = memref.load %arg3[%c4_88, %c6_89] : memref<8x32xf32, #tpu.memory_space<smem>>
    %175 = vector.broadcast %174 : f32 to vector<8x128xf32>
    %176 = arith.mulf %0, %175 : vector<8x128xf32>
    %c5_90 = arith.constant 5 : index
    %c6_91 = arith.constant 6 : index
    %177 = memref.load %arg3[%c5_90, %c6_91] : memref<8x32xf32, #tpu.memory_space<smem>>
    %178 = vector.broadcast %177 : f32 to vector<8x128xf32>
    %179 = arith.addf %176, %178 : vector<8x128xf32>
    %cst_92 = arith.constant 0.00999999977 : f32
    %180 = vector.broadcast %cst_92 : f32 to vector<8x128xf32>
    %181 = arith.mulf %180, %179 : vector<8x128xf32>
    %182 = arith.maximumf %179, %181 : vector<8x128xf32>
    %c6_93 = arith.constant 6 : index
    %c6_94 = arith.constant 6 : index
    %183 = memref.load %arg3[%c6_93, %c6_94] : memref<8x32xf32, #tpu.memory_space<smem>>
    %184 = vector.broadcast %183 : f32 to vector<8x128xf32>
    %185 = arith.mulf %182, %184 : vector<8x128xf32>
    %186 = arith.addf %160, %185 : vector<8x128xf32>
    %c0_95 = arith.constant 0 : index
    %c7_96 = arith.constant 7 : index
    %187 = memref.load %arg3[%c0_95, %c7_96] : memref<8x32xf32, #tpu.memory_space<smem>>
    %188 = vector.broadcast %187 : f32 to vector<8x128xf32>
    %189 = arith.mulf %0, %188 : vector<8x128xf32>
    %c1_97 = arith.constant 1 : index
    %c7_98 = arith.constant 7 : index
    %190 = memref.load %arg3[%c1_97, %c7_98] : memref<8x32xf32, #tpu.memory_space<smem>>
    %191 = vector.broadcast %190 : f32 to vector<8x128xf32>
    %192 = arith.addf %189, %191 : vector<8x128xf32>
    %cst_99 = arith.constant 0.00999999977 : f32
    %193 = vector.broadcast %cst_99 : f32 to vector<8x128xf32>
    %194 = arith.mulf %193, %192 : vector<8x128xf32>
    %195 = arith.maximumf %192, %194 : vector<8x128xf32>
    %c2_100 = arith.constant 2 : index
    %c7_101 = arith.constant 7 : index
    %196 = memref.load %arg3[%c2_100, %c7_101] : memref<8x32xf32, #tpu.memory_space<smem>>
    %197 = vector.broadcast %196 : f32 to vector<8x128xf32>
    %198 = arith.mulf %195, %197 : vector<8x128xf32>
    %199 = arith.addf %173, %198 : vector<8x128xf32>
    %c4_102 = arith.constant 4 : index
    %c7_103 = arith.constant 7 : index
    %200 = memref.load %arg3[%c4_102, %c7_103] : memref<8x32xf32, #tpu.memory_space<smem>>
    %201 = vector.broadcast %200 : f32 to vector<8x128xf32>
    %202 = arith.mulf %0, %201 : vector<8x128xf32>
    %c5_104 = arith.constant 5 : index
    %c7_105 = arith.constant 7 : index
    %203 = memref.load %arg3[%c5_104, %c7_105] : memref<8x32xf32, #tpu.memory_space<smem>>
    %204 = vector.broadcast %203 : f32 to vector<8x128xf32>
    %205 = arith.addf %202, %204 : vector<8x128xf32>
    %cst_106 = arith.constant 0.00999999977 : f32
    %206 = vector.broadcast %cst_106 : f32 to vector<8x128xf32>
    %207 = arith.mulf %206, %205 : vector<8x128xf32>
    %208 = arith.maximumf %205, %207 : vector<8x128xf32>
    %c6_107 = arith.constant 6 : index
    %c7_108 = arith.constant 7 : index
    %209 = memref.load %arg3[%c6_107, %c7_108] : memref<8x32xf32, #tpu.memory_space<smem>>
    %210 = vector.broadcast %209 : f32 to vector<8x128xf32>
    %211 = arith.mulf %208, %210 : vector<8x128xf32>
    %212 = arith.addf %186, %211 : vector<8x128xf32>
    %c0_109 = arith.constant 0 : index
    %c8 = arith.constant 8 : index
    %213 = memref.load %arg3[%c0_109, %c8] : memref<8x32xf32, #tpu.memory_space<smem>>
    %214 = vector.broadcast %213 : f32 to vector<8x128xf32>
    %215 = arith.mulf %0, %214 : vector<8x128xf32>
    %c1_110 = arith.constant 1 : index
    %c8_111 = arith.constant 8 : index
    %216 = memref.load %arg3[%c1_110, %c8_111] : memref<8x32xf32, #tpu.memory_space<smem>>
    %217 = vector.broadcast %216 : f32 to vector<8x128xf32>
    %218 = arith.addf %215, %217 : vector<8x128xf32>
    %cst_112 = arith.constant 0.00999999977 : f32
    %219 = vector.broadcast %cst_112 : f32 to vector<8x128xf32>
    %220 = arith.mulf %219, %218 : vector<8x128xf32>
    %221 = arith.maximumf %218, %220 : vector<8x128xf32>
    %c2_113 = arith.constant 2 : index
    %c8_114 = arith.constant 8 : index
    %222 = memref.load %arg3[%c2_113, %c8_114] : memref<8x32xf32, #tpu.memory_space<smem>>
    %223 = vector.broadcast %222 : f32 to vector<8x128xf32>
    %224 = arith.mulf %221, %223 : vector<8x128xf32>
    %225 = arith.addf %199, %224 : vector<8x128xf32>
    %c4_115 = arith.constant 4 : index
    %c8_116 = arith.constant 8 : index
    %226 = memref.load %arg3[%c4_115, %c8_116] : memref<8x32xf32, #tpu.memory_space<smem>>
    %227 = vector.broadcast %226 : f32 to vector<8x128xf32>
    %228 = arith.mulf %0, %227 : vector<8x128xf32>
    %c5_117 = arith.constant 5 : index
    %c8_118 = arith.constant 8 : index
    %229 = memref.load %arg3[%c5_117, %c8_118] : memref<8x32xf32, #tpu.memory_space<smem>>
    %230 = vector.broadcast %229 : f32 to vector<8x128xf32>
    %231 = arith.addf %228, %230 : vector<8x128xf32>
    %cst_119 = arith.constant 0.00999999977 : f32
    %232 = vector.broadcast %cst_119 : f32 to vector<8x128xf32>
    %233 = arith.mulf %232, %231 : vector<8x128xf32>
    %234 = arith.maximumf %231, %233 : vector<8x128xf32>
    %c6_120 = arith.constant 6 : index
    %c8_121 = arith.constant 8 : index
    %235 = memref.load %arg3[%c6_120, %c8_121] : memref<8x32xf32, #tpu.memory_space<smem>>
    %236 = vector.broadcast %235 : f32 to vector<8x128xf32>
    %237 = arith.mulf %234, %236 : vector<8x128xf32>
    %238 = arith.addf %212, %237 : vector<8x128xf32>
    %c0_122 = arith.constant 0 : index
    %c9 = arith.constant 9 : index
    %239 = memref.load %arg3[%c0_122, %c9] : memref<8x32xf32, #tpu.memory_space<smem>>
    %240 = vector.broadcast %239 : f32 to vector<8x128xf32>
    %241 = arith.mulf %0, %240 : vector<8x128xf32>
    %c1_123 = arith.constant 1 : index
    %c9_124 = arith.constant 9 : index
    %242 = memref.load %arg3[%c1_123, %c9_124] : memref<8x32xf32, #tpu.memory_space<smem>>
    %243 = vector.broadcast %242 : f32 to vector<8x128xf32>
    %244 = arith.addf %241, %243 : vector<8x128xf32>
    %cst_125 = arith.constant 0.00999999977 : f32
    %245 = vector.broadcast %cst_125 : f32 to vector<8x128xf32>
    %246 = arith.mulf %245, %244 : vector<8x128xf32>
    %247 = arith.maximumf %244, %246 : vector<8x128xf32>
    %c2_126 = arith.constant 2 : index
    %c9_127 = arith.constant 9 : index
    %248 = memref.load %arg3[%c2_126, %c9_127] : memref<8x32xf32, #tpu.memory_space<smem>>
    %249 = vector.broadcast %248 : f32 to vector<8x128xf32>
    %250 = arith.mulf %247, %249 : vector<8x128xf32>
    %251 = arith.addf %225, %250 : vector<8x128xf32>
    %c4_128 = arith.constant 4 : index
    %c9_129 = arith.constant 9 : index
    %252 = memref.load %arg3[%c4_128, %c9_129] : memref<8x32xf32, #tpu.memory_space<smem>>
    %253 = vector.broadcast %252 : f32 to vector<8x128xf32>
    %254 = arith.mulf %0, %253 : vector<8x128xf32>
    %c5_130 = arith.constant 5 : index
    %c9_131 = arith.constant 9 : index
    %255 = memref.load %arg3[%c5_130, %c9_131] : memref<8x32xf32, #tpu.memory_space<smem>>
    %256 = vector.broadcast %255 : f32 to vector<8x128xf32>
    %257 = arith.addf %254, %256 : vector<8x128xf32>
    %cst_132 = arith.constant 0.00999999977 : f32
    %258 = vector.broadcast %cst_132 : f32 to vector<8x128xf32>
    %259 = arith.mulf %258, %257 : vector<8x128xf32>
    %260 = arith.maximumf %257, %259 : vector<8x128xf32>
    %c6_133 = arith.constant 6 : index
    %c9_134 = arith.constant 9 : index
    %261 = memref.load %arg3[%c6_133, %c9_134] : memref<8x32xf32, #tpu.memory_space<smem>>
    %262 = vector.broadcast %261 : f32 to vector<8x128xf32>
    %263 = arith.mulf %260, %262 : vector<8x128xf32>
    %264 = arith.addf %238, %263 : vector<8x128xf32>
    %c0_135 = arith.constant 0 : index
    %c10 = arith.constant 10 : index
    %265 = memref.load %arg3[%c0_135, %c10] : memref<8x32xf32, #tpu.memory_space<smem>>
    %266 = vector.broadcast %265 : f32 to vector<8x128xf32>
    %267 = arith.mulf %0, %266 : vector<8x128xf32>
    %c1_136 = arith.constant 1 : index
    %c10_137 = arith.constant 10 : index
    %268 = memref.load %arg3[%c1_136, %c10_137] : memref<8x32xf32, #tpu.memory_space<smem>>
    %269 = vector.broadcast %268 : f32 to vector<8x128xf32>
    %270 = arith.addf %267, %269 : vector<8x128xf32>
    %cst_138 = arith.constant 0.00999999977 : f32
    %271 = vector.broadcast %cst_138 : f32 to vector<8x128xf32>
    %272 = arith.mulf %271, %270 : vector<8x128xf32>
    %273 = arith.maximumf %270, %272 : vector<8x128xf32>
    %c2_139 = arith.constant 2 : index
    %c10_140 = arith.constant 10 : index
    %274 = memref.load %arg3[%c2_139, %c10_140] : memref<8x32xf32, #tpu.memory_space<smem>>
    %275 = vector.broadcast %274 : f32 to vector<8x128xf32>
    %276 = arith.mulf %273, %275 : vector<8x128xf32>
    %277 = arith.addf %251, %276 : vector<8x128xf32>
    %c4_141 = arith.constant 4 : index
    %c10_142 = arith.constant 10 : index
    %278 = memref.load %arg3[%c4_141, %c10_142] : memref<8x32xf32, #tpu.memory_space<smem>>
    %279 = vector.broadcast %278 : f32 to vector<8x128xf32>
    %280 = arith.mulf %0, %279 : vector<8x128xf32>
    %c5_143 = arith.constant 5 : index
    %c10_144 = arith.constant 10 : index
    %281 = memref.load %arg3[%c5_143, %c10_144] : memref<8x32xf32, #tpu.memory_space<smem>>
    %282 = vector.broadcast %281 : f32 to vector<8x128xf32>
    %283 = arith.addf %280, %282 : vector<8x128xf32>
    %cst_145 = arith.constant 0.00999999977 : f32
    %284 = vector.broadcast %cst_145 : f32 to vector<8x128xf32>
    %285 = arith.mulf %284, %283 : vector<8x128xf32>
    %286 = arith.maximumf %283, %285 : vector<8x128xf32>
    %c6_146 = arith.constant 6 : index
    %c10_147 = arith.constant 10 : index
    %287 = memref.load %arg3[%c6_146, %c10_147] : memref<8x32xf32, #tpu.memory_space<smem>>
    %288 = vector.broadcast %287 : f32 to vector<8x128xf32>
    %289 = arith.mulf %286, %288 : vector<8x128xf32>
    %290 = arith.addf %264, %289 : vector<8x128xf32>
    %c0_148 = arith.constant 0 : index
    %c11 = arith.constant 11 : index
    %291 = memref.load %arg3[%c0_148, %c11] : memref<8x32xf32, #tpu.memory_space<smem>>
    %292 = vector.broadcast %291 : f32 to vector<8x128xf32>
    %293 = arith.mulf %0, %292 : vector<8x128xf32>
    %c1_149 = arith.constant 1 : index
    %c11_150 = arith.constant 11 : index
    %294 = memref.load %arg3[%c1_149, %c11_150] : memref<8x32xf32, #tpu.memory_space<smem>>
    %295 = vector.broadcast %294 : f32 to vector<8x128xf32>
    %296 = arith.addf %293, %295 : vector<8x128xf32>
    %cst_151 = arith.constant 0.00999999977 : f32
    %297 = vector.broadcast %cst_151 : f32 to vector<8x128xf32>
    %298 = arith.mulf %297, %296 : vector<8x128xf32>
    %299 = arith.maximumf %296, %298 : vector<8x128xf32>
    %c2_152 = arith.constant 2 : index
    %c11_153 = arith.constant 11 : index
    %300 = memref.load %arg3[%c2_152, %c11_153] : memref<8x32xf32, #tpu.memory_space<smem>>
    %301 = vector.broadcast %300 : f32 to vector<8x128xf32>
    %302 = arith.mulf %299, %301 : vector<8x128xf32>
    %303 = arith.addf %277, %302 : vector<8x128xf32>
    %c4_154 = arith.constant 4 : index
    %c11_155 = arith.constant 11 : index
    %304 = memref.load %arg3[%c4_154, %c11_155] : memref<8x32xf32, #tpu.memory_space<smem>>
    %305 = vector.broadcast %304 : f32 to vector<8x128xf32>
    %306 = arith.mulf %0, %305 : vector<8x128xf32>
    %c5_156 = arith.constant 5 : index
    %c11_157 = arith.constant 11 : index
    %307 = memref.load %arg3[%c5_156, %c11_157] : memref<8x32xf32, #tpu.memory_space<smem>>
    %308 = vector.broadcast %307 : f32 to vector<8x128xf32>
    %309 = arith.addf %306, %308 : vector<8x128xf32>
    %cst_158 = arith.constant 0.00999999977 : f32
    %310 = vector.broadcast %cst_158 : f32 to vector<8x128xf32>
    %311 = arith.mulf %310, %309 : vector<8x128xf32>
    %312 = arith.maximumf %309, %311 : vector<8x128xf32>
    %c6_159 = arith.constant 6 : index
    %c11_160 = arith.constant 11 : index
    %313 = memref.load %arg3[%c6_159, %c11_160] : memref<8x32xf32, #tpu.memory_space<smem>>
    %314 = vector.broadcast %313 : f32 to vector<8x128xf32>
    %315 = arith.mulf %312, %314 : vector<8x128xf32>
    %316 = arith.addf %290, %315 : vector<8x128xf32>
    %c0_161 = arith.constant 0 : index
    %c12 = arith.constant 12 : index
    %317 = memref.load %arg3[%c0_161, %c12] : memref<8x32xf32, #tpu.memory_space<smem>>
    %318 = vector.broadcast %317 : f32 to vector<8x128xf32>
    %319 = arith.mulf %0, %318 : vector<8x128xf32>
    %c1_162 = arith.constant 1 : index
    %c12_163 = arith.constant 12 : index
    %320 = memref.load %arg3[%c1_162, %c12_163] : memref<8x32xf32, #tpu.memory_space<smem>>
    %321 = vector.broadcast %320 : f32 to vector<8x128xf32>
    %322 = arith.addf %319, %321 : vector<8x128xf32>
    %cst_164 = arith.constant 0.00999999977 : f32
    %323 = vector.broadcast %cst_164 : f32 to vector<8x128xf32>
    %324 = arith.mulf %323, %322 : vector<8x128xf32>
    %325 = arith.maximumf %322, %324 : vector<8x128xf32>
    %c2_165 = arith.constant 2 : index
    %c12_166 = arith.constant 12 : index
    %326 = memref.load %arg3[%c2_165, %c12_166] : memref<8x32xf32, #tpu.memory_space<smem>>
    %327 = vector.broadcast %326 : f32 to vector<8x128xf32>
    %328 = arith.mulf %325, %327 : vector<8x128xf32>
    %329 = arith.addf %303, %328 : vector<8x128xf32>
    %c4_167 = arith.constant 4 : index
    %c12_168 = arith.constant 12 : index
    %330 = memref.load %arg3[%c4_167, %c12_168] : memref<8x32xf32, #tpu.memory_space<smem>>
    %331 = vector.broadcast %330 : f32 to vector<8x128xf32>
    %332 = arith.mulf %0, %331 : vector<8x128xf32>
    %c5_169 = arith.constant 5 : index
    %c12_170 = arith.constant 12 : index
    %333 = memref.load %arg3[%c5_169, %c12_170] : memref<8x32xf32, #tpu.memory_space<smem>>
    %334 = vector.broadcast %333 : f32 to vector<8x128xf32>
    %335 = arith.addf %332, %334 : vector<8x128xf32>
    %cst_171 = arith.constant 0.00999999977 : f32
    %336 = vector.broadcast %cst_171 : f32 to vector<8x128xf32>
    %337 = arith.mulf %336, %335 : vector<8x128xf32>
    %338 = arith.maximumf %335, %337 : vector<8x128xf32>
    %c6_172 = arith.constant 6 : index
    %c12_173 = arith.constant 12 : index
    %339 = memref.load %arg3[%c6_172, %c12_173] : memref<8x32xf32, #tpu.memory_space<smem>>
    %340 = vector.broadcast %339 : f32 to vector<8x128xf32>
    %341 = arith.mulf %338, %340 : vector<8x128xf32>
    %342 = arith.addf %316, %341 : vector<8x128xf32>
    %c0_174 = arith.constant 0 : index
    %c13 = arith.constant 13 : index
    %343 = memref.load %arg3[%c0_174, %c13] : memref<8x32xf32, #tpu.memory_space<smem>>
    %344 = vector.broadcast %343 : f32 to vector<8x128xf32>
    %345 = arith.mulf %0, %344 : vector<8x128xf32>
    %c1_175 = arith.constant 1 : index
    %c13_176 = arith.constant 13 : index
    %346 = memref.load %arg3[%c1_175, %c13_176] : memref<8x32xf32, #tpu.memory_space<smem>>
    %347 = vector.broadcast %346 : f32 to vector<8x128xf32>
    %348 = arith.addf %345, %347 : vector<8x128xf32>
    %cst_177 = arith.constant 0.00999999977 : f32
    %349 = vector.broadcast %cst_177 : f32 to vector<8x128xf32>
    %350 = arith.mulf %349, %348 : vector<8x128xf32>
    %351 = arith.maximumf %348, %350 : vector<8x128xf32>
    %c2_178 = arith.constant 2 : index
    %c13_179 = arith.constant 13 : index
    %352 = memref.load %arg3[%c2_178, %c13_179] : memref<8x32xf32, #tpu.memory_space<smem>>
    %353 = vector.broadcast %352 : f32 to vector<8x128xf32>
    %354 = arith.mulf %351, %353 : vector<8x128xf32>
    %355 = arith.addf %329, %354 : vector<8x128xf32>
    %c4_180 = arith.constant 4 : index
    %c13_181 = arith.constant 13 : index
    %356 = memref.load %arg3[%c4_180, %c13_181] : memref<8x32xf32, #tpu.memory_space<smem>>
    %357 = vector.broadcast %356 : f32 to vector<8x128xf32>
    %358 = arith.mulf %0, %357 : vector<8x128xf32>
    %c5_182 = arith.constant 5 : index
    %c13_183 = arith.constant 13 : index
    %359 = memref.load %arg3[%c5_182, %c13_183] : memref<8x32xf32, #tpu.memory_space<smem>>
    %360 = vector.broadcast %359 : f32 to vector<8x128xf32>
    %361 = arith.addf %358, %360 : vector<8x128xf32>
    %cst_184 = arith.constant 0.00999999977 : f32
    %362 = vector.broadcast %cst_184 : f32 to vector<8x128xf32>
    %363 = arith.mulf %362, %361 : vector<8x128xf32>
    %364 = arith.maximumf %361, %363 : vector<8x128xf32>
    %c6_185 = arith.constant 6 : index
    %c13_186 = arith.constant 13 : index
    %365 = memref.load %arg3[%c6_185, %c13_186] : memref<8x32xf32, #tpu.memory_space<smem>>
    %366 = vector.broadcast %365 : f32 to vector<8x128xf32>
    %367 = arith.mulf %364, %366 : vector<8x128xf32>
    %368 = arith.addf %342, %367 : vector<8x128xf32>
    %c0_187 = arith.constant 0 : index
    %c14 = arith.constant 14 : index
    %369 = memref.load %arg3[%c0_187, %c14] : memref<8x32xf32, #tpu.memory_space<smem>>
    %370 = vector.broadcast %369 : f32 to vector<8x128xf32>
    %371 = arith.mulf %0, %370 : vector<8x128xf32>
    %c1_188 = arith.constant 1 : index
    %c14_189 = arith.constant 14 : index
    %372 = memref.load %arg3[%c1_188, %c14_189] : memref<8x32xf32, #tpu.memory_space<smem>>
    %373 = vector.broadcast %372 : f32 to vector<8x128xf32>
    %374 = arith.addf %371, %373 : vector<8x128xf32>
    %cst_190 = arith.constant 0.00999999977 : f32
    %375 = vector.broadcast %cst_190 : f32 to vector<8x128xf32>
    %376 = arith.mulf %375, %374 : vector<8x128xf32>
    %377 = arith.maximumf %374, %376 : vector<8x128xf32>
    %c2_191 = arith.constant 2 : index
    %c14_192 = arith.constant 14 : index
    %378 = memref.load %arg3[%c2_191, %c14_192] : memref<8x32xf32, #tpu.memory_space<smem>>
    %379 = vector.broadcast %378 : f32 to vector<8x128xf32>
    %380 = arith.mulf %377, %379 : vector<8x128xf32>
    %381 = arith.addf %355, %380 : vector<8x128xf32>
    %c4_193 = arith.constant 4 : index
    %c14_194 = arith.constant 14 : index
    %382 = memref.load %arg3[%c4_193, %c14_194] : memref<8x32xf32, #tpu.memory_space<smem>>
    %383 = vector.broadcast %382 : f32 to vector<8x128xf32>
    %384 = arith.mulf %0, %383 : vector<8x128xf32>
    %c5_195 = arith.constant 5 : index
    %c14_196 = arith.constant 14 : index
    %385 = memref.load %arg3[%c5_195, %c14_196] : memref<8x32xf32, #tpu.memory_space<smem>>
    %386 = vector.broadcast %385 : f32 to vector<8x128xf32>
    %387 = arith.addf %384, %386 : vector<8x128xf32>
    %cst_197 = arith.constant 0.00999999977 : f32
    %388 = vector.broadcast %cst_197 : f32 to vector<8x128xf32>
    %389 = arith.mulf %388, %387 : vector<8x128xf32>
    %390 = arith.maximumf %387, %389 : vector<8x128xf32>
    %c6_198 = arith.constant 6 : index
    %c14_199 = arith.constant 14 : index
    %391 = memref.load %arg3[%c6_198, %c14_199] : memref<8x32xf32, #tpu.memory_space<smem>>
    %392 = vector.broadcast %391 : f32 to vector<8x128xf32>
    %393 = arith.mulf %390, %392 : vector<8x128xf32>
    %394 = arith.addf %368, %393 : vector<8x128xf32>
    %c0_200 = arith.constant 0 : index
    %c15 = arith.constant 15 : index
    %395 = memref.load %arg3[%c0_200, %c15] : memref<8x32xf32, #tpu.memory_space<smem>>
    %396 = vector.broadcast %395 : f32 to vector<8x128xf32>
    %397 = arith.mulf %0, %396 : vector<8x128xf32>
    %c1_201 = arith.constant 1 : index
    %c15_202 = arith.constant 15 : index
    %398 = memref.load %arg3[%c1_201, %c15_202] : memref<8x32xf32, #tpu.memory_space<smem>>
    %399 = vector.broadcast %398 : f32 to vector<8x128xf32>
    %400 = arith.addf %397, %399 : vector<8x128xf32>
    %cst_203 = arith.constant 0.00999999977 : f32
    %401 = vector.broadcast %cst_203 : f32 to vector<8x128xf32>
    %402 = arith.mulf %401, %400 : vector<8x128xf32>
    %403 = arith.maximumf %400, %402 : vector<8x128xf32>
    %c2_204 = arith.constant 2 : index
    %c15_205 = arith.constant 15 : index
    %404 = memref.load %arg3[%c2_204, %c15_205] : memref<8x32xf32, #tpu.memory_space<smem>>
    %405 = vector.broadcast %404 : f32 to vector<8x128xf32>
    %406 = arith.mulf %403, %405 : vector<8x128xf32>
    %407 = arith.addf %381, %406 : vector<8x128xf32>
    %c4_206 = arith.constant 4 : index
    %c15_207 = arith.constant 15 : index
    %408 = memref.load %arg3[%c4_206, %c15_207] : memref<8x32xf32, #tpu.memory_space<smem>>
    %409 = vector.broadcast %408 : f32 to vector<8x128xf32>
    %410 = arith.mulf %0, %409 : vector<8x128xf32>
    %c5_208 = arith.constant 5 : index
    %c15_209 = arith.constant 15 : index
    %411 = memref.load %arg3[%c5_208, %c15_209] : memref<8x32xf32, #tpu.memory_space<smem>>
    %412 = vector.broadcast %411 : f32 to vector<8x128xf32>
    %413 = arith.addf %410, %412 : vector<8x128xf32>
    %cst_210 = arith.constant 0.00999999977 : f32
    %414 = vector.broadcast %cst_210 : f32 to vector<8x128xf32>
    %415 = arith.mulf %414, %413 : vector<8x128xf32>
    %416 = arith.maximumf %413, %415 : vector<8x128xf32>
    %c6_211 = arith.constant 6 : index
    %c15_212 = arith.constant 15 : index
    %417 = memref.load %arg3[%c6_211, %c15_212] : memref<8x32xf32, #tpu.memory_space<smem>>
    %418 = vector.broadcast %417 : f32 to vector<8x128xf32>
    %419 = arith.mulf %416, %418 : vector<8x128xf32>
    %420 = arith.addf %394, %419 : vector<8x128xf32>
    %c0_213 = arith.constant 0 : index
    %c16 = arith.constant 16 : index
    %421 = memref.load %arg3[%c0_213, %c16] : memref<8x32xf32, #tpu.memory_space<smem>>
    %422 = vector.broadcast %421 : f32 to vector<8x128xf32>
    %423 = arith.mulf %0, %422 : vector<8x128xf32>
    %c1_214 = arith.constant 1 : index
    %c16_215 = arith.constant 16 : index
    %424 = memref.load %arg3[%c1_214, %c16_215] : memref<8x32xf32, #tpu.memory_space<smem>>
    %425 = vector.broadcast %424 : f32 to vector<8x128xf32>
    %426 = arith.addf %423, %425 : vector<8x128xf32>
    %cst_216 = arith.constant 0.00999999977 : f32
    %427 = vector.broadcast %cst_216 : f32 to vector<8x128xf32>
    %428 = arith.mulf %427, %426 : vector<8x128xf32>
    %429 = arith.maximumf %426, %428 : vector<8x128xf32>
    %c2_217 = arith.constant 2 : index
    %c16_218 = arith.constant 16 : index
    %430 = memref.load %arg3[%c2_217, %c16_218] : memref<8x32xf32, #tpu.memory_space<smem>>
    %431 = vector.broadcast %430 : f32 to vector<8x128xf32>
    %432 = arith.mulf %429, %431 : vector<8x128xf32>
    %433 = arith.addf %407, %432 : vector<8x128xf32>
    %c4_219 = arith.constant 4 : index
    %c16_220 = arith.constant 16 : index
    %434 = memref.load %arg3[%c4_219, %c16_220] : memref<8x32xf32, #tpu.memory_space<smem>>
    %435 = vector.broadcast %434 : f32 to vector<8x128xf32>
    %436 = arith.mulf %0, %435 : vector<8x128xf32>
    %c5_221 = arith.constant 5 : index
    %c16_222 = arith.constant 16 : index
    %437 = memref.load %arg3[%c5_221, %c16_222] : memref<8x32xf32, #tpu.memory_space<smem>>
    %438 = vector.broadcast %437 : f32 to vector<8x128xf32>
    %439 = arith.addf %436, %438 : vector<8x128xf32>
    %cst_223 = arith.constant 0.00999999977 : f32
    %440 = vector.broadcast %cst_223 : f32 to vector<8x128xf32>
    %441 = arith.mulf %440, %439 : vector<8x128xf32>
    %442 = arith.maximumf %439, %441 : vector<8x128xf32>
    %c6_224 = arith.constant 6 : index
    %c16_225 = arith.constant 16 : index
    %443 = memref.load %arg3[%c6_224, %c16_225] : memref<8x32xf32, #tpu.memory_space<smem>>
    %444 = vector.broadcast %443 : f32 to vector<8x128xf32>
    %445 = arith.mulf %442, %444 : vector<8x128xf32>
    %446 = arith.addf %420, %445 : vector<8x128xf32>
    %c0_226 = arith.constant 0 : index
    %c17 = arith.constant 17 : index
    %447 = memref.load %arg3[%c0_226, %c17] : memref<8x32xf32, #tpu.memory_space<smem>>
    %448 = vector.broadcast %447 : f32 to vector<8x128xf32>
    %449 = arith.mulf %0, %448 : vector<8x128xf32>
    %c1_227 = arith.constant 1 : index
    %c17_228 = arith.constant 17 : index
    %450 = memref.load %arg3[%c1_227, %c17_228] : memref<8x32xf32, #tpu.memory_space<smem>>
    %451 = vector.broadcast %450 : f32 to vector<8x128xf32>
    %452 = arith.addf %449, %451 : vector<8x128xf32>
    %cst_229 = arith.constant 0.00999999977 : f32
    %453 = vector.broadcast %cst_229 : f32 to vector<8x128xf32>
    %454 = arith.mulf %453, %452 : vector<8x128xf32>
    %455 = arith.maximumf %452, %454 : vector<8x128xf32>
    %c2_230 = arith.constant 2 : index
    %c17_231 = arith.constant 17 : index
    %456 = memref.load %arg3[%c2_230, %c17_231] : memref<8x32xf32, #tpu.memory_space<smem>>
    %457 = vector.broadcast %456 : f32 to vector<8x128xf32>
    %458 = arith.mulf %455, %457 : vector<8x128xf32>
    %459 = arith.addf %433, %458 : vector<8x128xf32>
    %c4_232 = arith.constant 4 : index
    %c17_233 = arith.constant 17 : index
    %460 = memref.load %arg3[%c4_232, %c17_233] : memref<8x32xf32, #tpu.memory_space<smem>>
    %461 = vector.broadcast %460 : f32 to vector<8x128xf32>
    %462 = arith.mulf %0, %461 : vector<8x128xf32>
    %c5_234 = arith.constant 5 : index
    %c17_235 = arith.constant 17 : index
    %463 = memref.load %arg3[%c5_234, %c17_235] : memref<8x32xf32, #tpu.memory_space<smem>>
    %464 = vector.broadcast %463 : f32 to vector<8x128xf32>
    %465 = arith.addf %462, %464 : vector<8x128xf32>
    %cst_236 = arith.constant 0.00999999977 : f32
    %466 = vector.broadcast %cst_236 : f32 to vector<8x128xf32>
    %467 = arith.mulf %466, %465 : vector<8x128xf32>
    %468 = arith.maximumf %465, %467 : vector<8x128xf32>
    %c6_237 = arith.constant 6 : index
    %c17_238 = arith.constant 17 : index
    %469 = memref.load %arg3[%c6_237, %c17_238] : memref<8x32xf32, #tpu.memory_space<smem>>
    %470 = vector.broadcast %469 : f32 to vector<8x128xf32>
    %471 = arith.mulf %468, %470 : vector<8x128xf32>
    %472 = arith.addf %446, %471 : vector<8x128xf32>
    %c0_239 = arith.constant 0 : index
    %c18 = arith.constant 18 : index
    %473 = memref.load %arg3[%c0_239, %c18] : memref<8x32xf32, #tpu.memory_space<smem>>
    %474 = vector.broadcast %473 : f32 to vector<8x128xf32>
    %475 = arith.mulf %0, %474 : vector<8x128xf32>
    %c1_240 = arith.constant 1 : index
    %c18_241 = arith.constant 18 : index
    %476 = memref.load %arg3[%c1_240, %c18_241] : memref<8x32xf32, #tpu.memory_space<smem>>
    %477 = vector.broadcast %476 : f32 to vector<8x128xf32>
    %478 = arith.addf %475, %477 : vector<8x128xf32>
    %cst_242 = arith.constant 0.00999999977 : f32
    %479 = vector.broadcast %cst_242 : f32 to vector<8x128xf32>
    %480 = arith.mulf %479, %478 : vector<8x128xf32>
    %481 = arith.maximumf %478, %480 : vector<8x128xf32>
    %c2_243 = arith.constant 2 : index
    %c18_244 = arith.constant 18 : index
    %482 = memref.load %arg3[%c2_243, %c18_244] : memref<8x32xf32, #tpu.memory_space<smem>>
    %483 = vector.broadcast %482 : f32 to vector<8x128xf32>
    %484 = arith.mulf %481, %483 : vector<8x128xf32>
    %485 = arith.addf %459, %484 : vector<8x128xf32>
    %c4_245 = arith.constant 4 : index
    %c18_246 = arith.constant 18 : index
    %486 = memref.load %arg3[%c4_245, %c18_246] : memref<8x32xf32, #tpu.memory_space<smem>>
    %487 = vector.broadcast %486 : f32 to vector<8x128xf32>
    %488 = arith.mulf %0, %487 : vector<8x128xf32>
    %c5_247 = arith.constant 5 : index
    %c18_248 = arith.constant 18 : index
    %489 = memref.load %arg3[%c5_247, %c18_248] : memref<8x32xf32, #tpu.memory_space<smem>>
    %490 = vector.broadcast %489 : f32 to vector<8x128xf32>
    %491 = arith.addf %488, %490 : vector<8x128xf32>
    %cst_249 = arith.constant 0.00999999977 : f32
    %492 = vector.broadcast %cst_249 : f32 to vector<8x128xf32>
    %493 = arith.mulf %492, %491 : vector<8x128xf32>
    %494 = arith.maximumf %491, %493 : vector<8x128xf32>
    %c6_250 = arith.constant 6 : index
    %c18_251 = arith.constant 18 : index
    %495 = memref.load %arg3[%c6_250, %c18_251] : memref<8x32xf32, #tpu.memory_space<smem>>
    %496 = vector.broadcast %495 : f32 to vector<8x128xf32>
    %497 = arith.mulf %494, %496 : vector<8x128xf32>
    %498 = arith.addf %472, %497 : vector<8x128xf32>
    %c0_252 = arith.constant 0 : index
    %c19 = arith.constant 19 : index
    %499 = memref.load %arg3[%c0_252, %c19] : memref<8x32xf32, #tpu.memory_space<smem>>
    %500 = vector.broadcast %499 : f32 to vector<8x128xf32>
    %501 = arith.mulf %0, %500 : vector<8x128xf32>
    %c1_253 = arith.constant 1 : index
    %c19_254 = arith.constant 19 : index
    %502 = memref.load %arg3[%c1_253, %c19_254] : memref<8x32xf32, #tpu.memory_space<smem>>
    %503 = vector.broadcast %502 : f32 to vector<8x128xf32>
    %504 = arith.addf %501, %503 : vector<8x128xf32>
    %cst_255 = arith.constant 0.00999999977 : f32
    %505 = vector.broadcast %cst_255 : f32 to vector<8x128xf32>
    %506 = arith.mulf %505, %504 : vector<8x128xf32>
    %507 = arith.maximumf %504, %506 : vector<8x128xf32>
    %c2_256 = arith.constant 2 : index
    %c19_257 = arith.constant 19 : index
    %508 = memref.load %arg3[%c2_256, %c19_257] : memref<8x32xf32, #tpu.memory_space<smem>>
    %509 = vector.broadcast %508 : f32 to vector<8x128xf32>
    %510 = arith.mulf %507, %509 : vector<8x128xf32>
    %511 = arith.addf %485, %510 : vector<8x128xf32>
    %c4_258 = arith.constant 4 : index
    %c19_259 = arith.constant 19 : index
    %512 = memref.load %arg3[%c4_258, %c19_259] : memref<8x32xf32, #tpu.memory_space<smem>>
    %513 = vector.broadcast %512 : f32 to vector<8x128xf32>
    %514 = arith.mulf %0, %513 : vector<8x128xf32>
    %c5_260 = arith.constant 5 : index
    %c19_261 = arith.constant 19 : index
    %515 = memref.load %arg3[%c5_260, %c19_261] : memref<8x32xf32, #tpu.memory_space<smem>>
    %516 = vector.broadcast %515 : f32 to vector<8x128xf32>
    %517 = arith.addf %514, %516 : vector<8x128xf32>
    %cst_262 = arith.constant 0.00999999977 : f32
    %518 = vector.broadcast %cst_262 : f32 to vector<8x128xf32>
    %519 = arith.mulf %518, %517 : vector<8x128xf32>
    %520 = arith.maximumf %517, %519 : vector<8x128xf32>
    %c6_263 = arith.constant 6 : index
    %c19_264 = arith.constant 19 : index
    %521 = memref.load %arg3[%c6_263, %c19_264] : memref<8x32xf32, #tpu.memory_space<smem>>
    %522 = vector.broadcast %521 : f32 to vector<8x128xf32>
    %523 = arith.mulf %520, %522 : vector<8x128xf32>
    %524 = arith.addf %498, %523 : vector<8x128xf32>
    %c0_265 = arith.constant 0 : index
    %c20 = arith.constant 20 : index
    %525 = memref.load %arg3[%c0_265, %c20] : memref<8x32xf32, #tpu.memory_space<smem>>
    %526 = vector.broadcast %525 : f32 to vector<8x128xf32>
    %527 = arith.mulf %0, %526 : vector<8x128xf32>
    %c1_266 = arith.constant 1 : index
    %c20_267 = arith.constant 20 : index
    %528 = memref.load %arg3[%c1_266, %c20_267] : memref<8x32xf32, #tpu.memory_space<smem>>
    %529 = vector.broadcast %528 : f32 to vector<8x128xf32>
    %530 = arith.addf %527, %529 : vector<8x128xf32>
    %cst_268 = arith.constant 0.00999999977 : f32
    %531 = vector.broadcast %cst_268 : f32 to vector<8x128xf32>
    %532 = arith.mulf %531, %530 : vector<8x128xf32>
    %533 = arith.maximumf %530, %532 : vector<8x128xf32>
    %c2_269 = arith.constant 2 : index
    %c20_270 = arith.constant 20 : index
    %534 = memref.load %arg3[%c2_269, %c20_270] : memref<8x32xf32, #tpu.memory_space<smem>>
    %535 = vector.broadcast %534 : f32 to vector<8x128xf32>
    %536 = arith.mulf %533, %535 : vector<8x128xf32>
    %537 = arith.addf %511, %536 : vector<8x128xf32>
    %c4_271 = arith.constant 4 : index
    %c20_272 = arith.constant 20 : index
    %538 = memref.load %arg3[%c4_271, %c20_272] : memref<8x32xf32, #tpu.memory_space<smem>>
    %539 = vector.broadcast %538 : f32 to vector<8x128xf32>
    %540 = arith.mulf %0, %539 : vector<8x128xf32>
    %c5_273 = arith.constant 5 : index
    %c20_274 = arith.constant 20 : index
    %541 = memref.load %arg3[%c5_273, %c20_274] : memref<8x32xf32, #tpu.memory_space<smem>>
    %542 = vector.broadcast %541 : f32 to vector<8x128xf32>
    %543 = arith.addf %540, %542 : vector<8x128xf32>
    %cst_275 = arith.constant 0.00999999977 : f32
    %544 = vector.broadcast %cst_275 : f32 to vector<8x128xf32>
    %545 = arith.mulf %544, %543 : vector<8x128xf32>
    %546 = arith.maximumf %543, %545 : vector<8x128xf32>
    %c6_276 = arith.constant 6 : index
    %c20_277 = arith.constant 20 : index
    %547 = memref.load %arg3[%c6_276, %c20_277] : memref<8x32xf32, #tpu.memory_space<smem>>
    %548 = vector.broadcast %547 : f32 to vector<8x128xf32>
    %549 = arith.mulf %546, %548 : vector<8x128xf32>
    %550 = arith.addf %524, %549 : vector<8x128xf32>
    %c0_278 = arith.constant 0 : index
    %c21 = arith.constant 21 : index
    %551 = memref.load %arg3[%c0_278, %c21] : memref<8x32xf32, #tpu.memory_space<smem>>
    %552 = vector.broadcast %551 : f32 to vector<8x128xf32>
    %553 = arith.mulf %0, %552 : vector<8x128xf32>
    %c1_279 = arith.constant 1 : index
    %c21_280 = arith.constant 21 : index
    %554 = memref.load %arg3[%c1_279, %c21_280] : memref<8x32xf32, #tpu.memory_space<smem>>
    %555 = vector.broadcast %554 : f32 to vector<8x128xf32>
    %556 = arith.addf %553, %555 : vector<8x128xf32>
    %cst_281 = arith.constant 0.00999999977 : f32
    %557 = vector.broadcast %cst_281 : f32 to vector<8x128xf32>
    %558 = arith.mulf %557, %556 : vector<8x128xf32>
    %559 = arith.maximumf %556, %558 : vector<8x128xf32>
    %c2_282 = arith.constant 2 : index
    %c21_283 = arith.constant 21 : index
    %560 = memref.load %arg3[%c2_282, %c21_283] : memref<8x32xf32, #tpu.memory_space<smem>>
    %561 = vector.broadcast %560 : f32 to vector<8x128xf32>
    %562 = arith.mulf %559, %561 : vector<8x128xf32>
    %563 = arith.addf %537, %562 : vector<8x128xf32>
    %c4_284 = arith.constant 4 : index
    %c21_285 = arith.constant 21 : index
    %564 = memref.load %arg3[%c4_284, %c21_285] : memref<8x32xf32, #tpu.memory_space<smem>>
    %565 = vector.broadcast %564 : f32 to vector<8x128xf32>
    %566 = arith.mulf %0, %565 : vector<8x128xf32>
    %c5_286 = arith.constant 5 : index
    %c21_287 = arith.constant 21 : index
    %567 = memref.load %arg3[%c5_286, %c21_287] : memref<8x32xf32, #tpu.memory_space<smem>>
    %568 = vector.broadcast %567 : f32 to vector<8x128xf32>
    %569 = arith.addf %566, %568 : vector<8x128xf32>
    %cst_288 = arith.constant 0.00999999977 : f32
    %570 = vector.broadcast %cst_288 : f32 to vector<8x128xf32>
    %571 = arith.mulf %570, %569 : vector<8x128xf32>
    %572 = arith.maximumf %569, %571 : vector<8x128xf32>
    %c6_289 = arith.constant 6 : index
    %c21_290 = arith.constant 21 : index
    %573 = memref.load %arg3[%c6_289, %c21_290] : memref<8x32xf32, #tpu.memory_space<smem>>
    %574 = vector.broadcast %573 : f32 to vector<8x128xf32>
    %575 = arith.mulf %572, %574 : vector<8x128xf32>
    %576 = arith.addf %550, %575 : vector<8x128xf32>
    %c0_291 = arith.constant 0 : index
    %c22 = arith.constant 22 : index
    %577 = memref.load %arg3[%c0_291, %c22] : memref<8x32xf32, #tpu.memory_space<smem>>
    %578 = vector.broadcast %577 : f32 to vector<8x128xf32>
    %579 = arith.mulf %0, %578 : vector<8x128xf32>
    %c1_292 = arith.constant 1 : index
    %c22_293 = arith.constant 22 : index
    %580 = memref.load %arg3[%c1_292, %c22_293] : memref<8x32xf32, #tpu.memory_space<smem>>
    %581 = vector.broadcast %580 : f32 to vector<8x128xf32>
    %582 = arith.addf %579, %581 : vector<8x128xf32>
    %cst_294 = arith.constant 0.00999999977 : f32
    %583 = vector.broadcast %cst_294 : f32 to vector<8x128xf32>
    %584 = arith.mulf %583, %582 : vector<8x128xf32>
    %585 = arith.maximumf %582, %584 : vector<8x128xf32>
    %c2_295 = arith.constant 2 : index
    %c22_296 = arith.constant 22 : index
    %586 = memref.load %arg3[%c2_295, %c22_296] : memref<8x32xf32, #tpu.memory_space<smem>>
    %587 = vector.broadcast %586 : f32 to vector<8x128xf32>
    %588 = arith.mulf %585, %587 : vector<8x128xf32>
    %589 = arith.addf %563, %588 : vector<8x128xf32>
    %c4_297 = arith.constant 4 : index
    %c22_298 = arith.constant 22 : index
    %590 = memref.load %arg3[%c4_297, %c22_298] : memref<8x32xf32, #tpu.memory_space<smem>>
    %591 = vector.broadcast %590 : f32 to vector<8x128xf32>
    %592 = arith.mulf %0, %591 : vector<8x128xf32>
    %c5_299 = arith.constant 5 : index
    %c22_300 = arith.constant 22 : index
    %593 = memref.load %arg3[%c5_299, %c22_300] : memref<8x32xf32, #tpu.memory_space<smem>>
    %594 = vector.broadcast %593 : f32 to vector<8x128xf32>
    %595 = arith.addf %592, %594 : vector<8x128xf32>
    %cst_301 = arith.constant 0.00999999977 : f32
    %596 = vector.broadcast %cst_301 : f32 to vector<8x128xf32>
    %597 = arith.mulf %596, %595 : vector<8x128xf32>
    %598 = arith.maximumf %595, %597 : vector<8x128xf32>
    %c6_302 = arith.constant 6 : index
    %c22_303 = arith.constant 22 : index
    %599 = memref.load %arg3[%c6_302, %c22_303] : memref<8x32xf32, #tpu.memory_space<smem>>
    %600 = vector.broadcast %599 : f32 to vector<8x128xf32>
    %601 = arith.mulf %598, %600 : vector<8x128xf32>
    %602 = arith.addf %576, %601 : vector<8x128xf32>
    %c0_304 = arith.constant 0 : index
    %c23 = arith.constant 23 : index
    %603 = memref.load %arg3[%c0_304, %c23] : memref<8x32xf32, #tpu.memory_space<smem>>
    %604 = vector.broadcast %603 : f32 to vector<8x128xf32>
    %605 = arith.mulf %0, %604 : vector<8x128xf32>
    %c1_305 = arith.constant 1 : index
    %c23_306 = arith.constant 23 : index
    %606 = memref.load %arg3[%c1_305, %c23_306] : memref<8x32xf32, #tpu.memory_space<smem>>
    %607 = vector.broadcast %606 : f32 to vector<8x128xf32>
    %608 = arith.addf %605, %607 : vector<8x128xf32>
    %cst_307 = arith.constant 0.00999999977 : f32
    %609 = vector.broadcast %cst_307 : f32 to vector<8x128xf32>
    %610 = arith.mulf %609, %608 : vector<8x128xf32>
    %611 = arith.maximumf %608, %610 : vector<8x128xf32>
    %c2_308 = arith.constant 2 : index
    %c23_309 = arith.constant 23 : index
    %612 = memref.load %arg3[%c2_308, %c23_309] : memref<8x32xf32, #tpu.memory_space<smem>>
    %613 = vector.broadcast %612 : f32 to vector<8x128xf32>
    %614 = arith.mulf %611, %613 : vector<8x128xf32>
    %615 = arith.addf %589, %614 : vector<8x128xf32>
    %c4_310 = arith.constant 4 : index
    %c23_311 = arith.constant 23 : index
    %616 = memref.load %arg3[%c4_310, %c23_311] : memref<8x32xf32, #tpu.memory_space<smem>>
    %617 = vector.broadcast %616 : f32 to vector<8x128xf32>
    %618 = arith.mulf %0, %617 : vector<8x128xf32>
    %c5_312 = arith.constant 5 : index
    %c23_313 = arith.constant 23 : index
    %619 = memref.load %arg3[%c5_312, %c23_313] : memref<8x32xf32, #tpu.memory_space<smem>>
    %620 = vector.broadcast %619 : f32 to vector<8x128xf32>
    %621 = arith.addf %618, %620 : vector<8x128xf32>
    %cst_314 = arith.constant 0.00999999977 : f32
    %622 = vector.broadcast %cst_314 : f32 to vector<8x128xf32>
    %623 = arith.mulf %622, %621 : vector<8x128xf32>
    %624 = arith.maximumf %621, %623 : vector<8x128xf32>
    %c6_315 = arith.constant 6 : index
    %c23_316 = arith.constant 23 : index
    %625 = memref.load %arg3[%c6_315, %c23_316] : memref<8x32xf32, #tpu.memory_space<smem>>
    %626 = vector.broadcast %625 : f32 to vector<8x128xf32>
    %627 = arith.mulf %624, %626 : vector<8x128xf32>
    %628 = arith.addf %602, %627 : vector<8x128xf32>
    %c0_317 = arith.constant 0 : index
    %c24 = arith.constant 24 : index
    %629 = memref.load %arg3[%c0_317, %c24] : memref<8x32xf32, #tpu.memory_space<smem>>
    %630 = vector.broadcast %629 : f32 to vector<8x128xf32>
    %631 = arith.mulf %0, %630 : vector<8x128xf32>
    %c1_318 = arith.constant 1 : index
    %c24_319 = arith.constant 24 : index
    %632 = memref.load %arg3[%c1_318, %c24_319] : memref<8x32xf32, #tpu.memory_space<smem>>
    %633 = vector.broadcast %632 : f32 to vector<8x128xf32>
    %634 = arith.addf %631, %633 : vector<8x128xf32>
    %cst_320 = arith.constant 0.00999999977 : f32
    %635 = vector.broadcast %cst_320 : f32 to vector<8x128xf32>
    %636 = arith.mulf %635, %634 : vector<8x128xf32>
    %637 = arith.maximumf %634, %636 : vector<8x128xf32>
    %c2_321 = arith.constant 2 : index
    %c24_322 = arith.constant 24 : index
    %638 = memref.load %arg3[%c2_321, %c24_322] : memref<8x32xf32, #tpu.memory_space<smem>>
    %639 = vector.broadcast %638 : f32 to vector<8x128xf32>
    %640 = arith.mulf %637, %639 : vector<8x128xf32>
    %641 = arith.addf %615, %640 : vector<8x128xf32>
    %c4_323 = arith.constant 4 : index
    %c24_324 = arith.constant 24 : index
    %642 = memref.load %arg3[%c4_323, %c24_324] : memref<8x32xf32, #tpu.memory_space<smem>>
    %643 = vector.broadcast %642 : f32 to vector<8x128xf32>
    %644 = arith.mulf %0, %643 : vector<8x128xf32>
    %c5_325 = arith.constant 5 : index
    %c24_326 = arith.constant 24 : index
    %645 = memref.load %arg3[%c5_325, %c24_326] : memref<8x32xf32, #tpu.memory_space<smem>>
    %646 = vector.broadcast %645 : f32 to vector<8x128xf32>
    %647 = arith.addf %644, %646 : vector<8x128xf32>
    %cst_327 = arith.constant 0.00999999977 : f32
    %648 = vector.broadcast %cst_327 : f32 to vector<8x128xf32>
    %649 = arith.mulf %648, %647 : vector<8x128xf32>
    %650 = arith.maximumf %647, %649 : vector<8x128xf32>
    %c6_328 = arith.constant 6 : index
    %c24_329 = arith.constant 24 : index
    %651 = memref.load %arg3[%c6_328, %c24_329] : memref<8x32xf32, #tpu.memory_space<smem>>
    %652 = vector.broadcast %651 : f32 to vector<8x128xf32>
    %653 = arith.mulf %650, %652 : vector<8x128xf32>
    %654 = arith.addf %628, %653 : vector<8x128xf32>
    %c0_330 = arith.constant 0 : index
    %c25 = arith.constant 25 : index
    %655 = memref.load %arg3[%c0_330, %c25] : memref<8x32xf32, #tpu.memory_space<smem>>
    %656 = vector.broadcast %655 : f32 to vector<8x128xf32>
    %657 = arith.mulf %0, %656 : vector<8x128xf32>
    %c1_331 = arith.constant 1 : index
    %c25_332 = arith.constant 25 : index
    %658 = memref.load %arg3[%c1_331, %c25_332] : memref<8x32xf32, #tpu.memory_space<smem>>
    %659 = vector.broadcast %658 : f32 to vector<8x128xf32>
    %660 = arith.addf %657, %659 : vector<8x128xf32>
    %cst_333 = arith.constant 0.00999999977 : f32
    %661 = vector.broadcast %cst_333 : f32 to vector<8x128xf32>
    %662 = arith.mulf %661, %660 : vector<8x128xf32>
    %663 = arith.maximumf %660, %662 : vector<8x128xf32>
    %c2_334 = arith.constant 2 : index
    %c25_335 = arith.constant 25 : index
    %664 = memref.load %arg3[%c2_334, %c25_335] : memref<8x32xf32, #tpu.memory_space<smem>>
    %665 = vector.broadcast %664 : f32 to vector<8x128xf32>
    %666 = arith.mulf %663, %665 : vector<8x128xf32>
    %667 = arith.addf %641, %666 : vector<8x128xf32>
    %c4_336 = arith.constant 4 : index
    %c25_337 = arith.constant 25 : index
    %668 = memref.load %arg3[%c4_336, %c25_337] : memref<8x32xf32, #tpu.memory_space<smem>>
    %669 = vector.broadcast %668 : f32 to vector<8x128xf32>
    %670 = arith.mulf %0, %669 : vector<8x128xf32>
    %c5_338 = arith.constant 5 : index
    %c25_339 = arith.constant 25 : index
    %671 = memref.load %arg3[%c5_338, %c25_339] : memref<8x32xf32, #tpu.memory_space<smem>>
    %672 = vector.broadcast %671 : f32 to vector<8x128xf32>
    %673 = arith.addf %670, %672 : vector<8x128xf32>
    %cst_340 = arith.constant 0.00999999977 : f32
    %674 = vector.broadcast %cst_340 : f32 to vector<8x128xf32>
    %675 = arith.mulf %674, %673 : vector<8x128xf32>
    %676 = arith.maximumf %673, %675 : vector<8x128xf32>
    %c6_341 = arith.constant 6 : index
    %c25_342 = arith.constant 25 : index
    %677 = memref.load %arg3[%c6_341, %c25_342] : memref<8x32xf32, #tpu.memory_space<smem>>
    %678 = vector.broadcast %677 : f32 to vector<8x128xf32>
    %679 = arith.mulf %676, %678 : vector<8x128xf32>
    %680 = arith.addf %654, %679 : vector<8x128xf32>
    %c0_343 = arith.constant 0 : index
    %c26 = arith.constant 26 : index
    %681 = memref.load %arg3[%c0_343, %c26] : memref<8x32xf32, #tpu.memory_space<smem>>
    %682 = vector.broadcast %681 : f32 to vector<8x128xf32>
    %683 = arith.mulf %0, %682 : vector<8x128xf32>
    %c1_344 = arith.constant 1 : index
    %c26_345 = arith.constant 26 : index
    %684 = memref.load %arg3[%c1_344, %c26_345] : memref<8x32xf32, #tpu.memory_space<smem>>
    %685 = vector.broadcast %684 : f32 to vector<8x128xf32>
    %686 = arith.addf %683, %685 : vector<8x128xf32>
    %cst_346 = arith.constant 0.00999999977 : f32
    %687 = vector.broadcast %cst_346 : f32 to vector<8x128xf32>
    %688 = arith.mulf %687, %686 : vector<8x128xf32>
    %689 = arith.maximumf %686, %688 : vector<8x128xf32>
    %c2_347 = arith.constant 2 : index
    %c26_348 = arith.constant 26 : index
    %690 = memref.load %arg3[%c2_347, %c26_348] : memref<8x32xf32, #tpu.memory_space<smem>>
    %691 = vector.broadcast %690 : f32 to vector<8x128xf32>
    %692 = arith.mulf %689, %691 : vector<8x128xf32>
    %693 = arith.addf %667, %692 : vector<8x128xf32>
    %c4_349 = arith.constant 4 : index
    %c26_350 = arith.constant 26 : index
    %694 = memref.load %arg3[%c4_349, %c26_350] : memref<8x32xf32, #tpu.memory_space<smem>>
    %695 = vector.broadcast %694 : f32 to vector<8x128xf32>
    %696 = arith.mulf %0, %695 : vector<8x128xf32>
    %c5_351 = arith.constant 5 : index
    %c26_352 = arith.constant 26 : index
    %697 = memref.load %arg3[%c5_351, %c26_352] : memref<8x32xf32, #tpu.memory_space<smem>>
    %698 = vector.broadcast %697 : f32 to vector<8x128xf32>
    %699 = arith.addf %696, %698 : vector<8x128xf32>
    %cst_353 = arith.constant 0.00999999977 : f32
    %700 = vector.broadcast %cst_353 : f32 to vector<8x128xf32>
    %701 = arith.mulf %700, %699 : vector<8x128xf32>
    %702 = arith.maximumf %699, %701 : vector<8x128xf32>
    %c6_354 = arith.constant 6 : index
    %c26_355 = arith.constant 26 : index
    %703 = memref.load %arg3[%c6_354, %c26_355] : memref<8x32xf32, #tpu.memory_space<smem>>
    %704 = vector.broadcast %703 : f32 to vector<8x128xf32>
    %705 = arith.mulf %702, %704 : vector<8x128xf32>
    %706 = arith.addf %680, %705 : vector<8x128xf32>
    %c0_356 = arith.constant 0 : index
    %c27 = arith.constant 27 : index
    %707 = memref.load %arg3[%c0_356, %c27] : memref<8x32xf32, #tpu.memory_space<smem>>
    %708 = vector.broadcast %707 : f32 to vector<8x128xf32>
    %709 = arith.mulf %0, %708 : vector<8x128xf32>
    %c1_357 = arith.constant 1 : index
    %c27_358 = arith.constant 27 : index
    %710 = memref.load %arg3[%c1_357, %c27_358] : memref<8x32xf32, #tpu.memory_space<smem>>
    %711 = vector.broadcast %710 : f32 to vector<8x128xf32>
    %712 = arith.addf %709, %711 : vector<8x128xf32>
    %cst_359 = arith.constant 0.00999999977 : f32
    %713 = vector.broadcast %cst_359 : f32 to vector<8x128xf32>
    %714 = arith.mulf %713, %712 : vector<8x128xf32>
    %715 = arith.maximumf %712, %714 : vector<8x128xf32>
    %c2_360 = arith.constant 2 : index
    %c27_361 = arith.constant 27 : index
    %716 = memref.load %arg3[%c2_360, %c27_361] : memref<8x32xf32, #tpu.memory_space<smem>>
    %717 = vector.broadcast %716 : f32 to vector<8x128xf32>
    %718 = arith.mulf %715, %717 : vector<8x128xf32>
    %719 = arith.addf %693, %718 : vector<8x128xf32>
    %c4_362 = arith.constant 4 : index
    %c27_363 = arith.constant 27 : index
    %720 = memref.load %arg3[%c4_362, %c27_363] : memref<8x32xf32, #tpu.memory_space<smem>>
    %721 = vector.broadcast %720 : f32 to vector<8x128xf32>
    %722 = arith.mulf %0, %721 : vector<8x128xf32>
    %c5_364 = arith.constant 5 : index
    %c27_365 = arith.constant 27 : index
    %723 = memref.load %arg3[%c5_364, %c27_365] : memref<8x32xf32, #tpu.memory_space<smem>>
    %724 = vector.broadcast %723 : f32 to vector<8x128xf32>
    %725 = arith.addf %722, %724 : vector<8x128xf32>
    %cst_366 = arith.constant 0.00999999977 : f32
    %726 = vector.broadcast %cst_366 : f32 to vector<8x128xf32>
    %727 = arith.mulf %726, %725 : vector<8x128xf32>
    %728 = arith.maximumf %725, %727 : vector<8x128xf32>
    %c6_367 = arith.constant 6 : index
    %c27_368 = arith.constant 27 : index
    %729 = memref.load %arg3[%c6_367, %c27_368] : memref<8x32xf32, #tpu.memory_space<smem>>
    %730 = vector.broadcast %729 : f32 to vector<8x128xf32>
    %731 = arith.mulf %728, %730 : vector<8x128xf32>
    %732 = arith.addf %706, %731 : vector<8x128xf32>
    %c0_369 = arith.constant 0 : index
    %c28 = arith.constant 28 : index
    %733 = memref.load %arg3[%c0_369, %c28] : memref<8x32xf32, #tpu.memory_space<smem>>
    %734 = vector.broadcast %733 : f32 to vector<8x128xf32>
    %735 = arith.mulf %0, %734 : vector<8x128xf32>
    %c1_370 = arith.constant 1 : index
    %c28_371 = arith.constant 28 : index
    %736 = memref.load %arg3[%c1_370, %c28_371] : memref<8x32xf32, #tpu.memory_space<smem>>
    %737 = vector.broadcast %736 : f32 to vector<8x128xf32>
    %738 = arith.addf %735, %737 : vector<8x128xf32>
    %cst_372 = arith.constant 0.00999999977 : f32
    %739 = vector.broadcast %cst_372 : f32 to vector<8x128xf32>
    %740 = arith.mulf %739, %738 : vector<8x128xf32>
    %741 = arith.maximumf %738, %740 : vector<8x128xf32>
    %c2_373 = arith.constant 2 : index
    %c28_374 = arith.constant 28 : index
    %742 = memref.load %arg3[%c2_373, %c28_374] : memref<8x32xf32, #tpu.memory_space<smem>>
    %743 = vector.broadcast %742 : f32 to vector<8x128xf32>
    %744 = arith.mulf %741, %743 : vector<8x128xf32>
    %745 = arith.addf %719, %744 : vector<8x128xf32>
    %c4_375 = arith.constant 4 : index
    %c28_376 = arith.constant 28 : index
    %746 = memref.load %arg3[%c4_375, %c28_376] : memref<8x32xf32, #tpu.memory_space<smem>>
    %747 = vector.broadcast %746 : f32 to vector<8x128xf32>
    %748 = arith.mulf %0, %747 : vector<8x128xf32>
    %c5_377 = arith.constant 5 : index
    %c28_378 = arith.constant 28 : index
    %749 = memref.load %arg3[%c5_377, %c28_378] : memref<8x32xf32, #tpu.memory_space<smem>>
    %750 = vector.broadcast %749 : f32 to vector<8x128xf32>
    %751 = arith.addf %748, %750 : vector<8x128xf32>
    %cst_379 = arith.constant 0.00999999977 : f32
    %752 = vector.broadcast %cst_379 : f32 to vector<8x128xf32>
    %753 = arith.mulf %752, %751 : vector<8x128xf32>
    %754 = arith.maximumf %751, %753 : vector<8x128xf32>
    %c6_380 = arith.constant 6 : index
    %c28_381 = arith.constant 28 : index
    %755 = memref.load %arg3[%c6_380, %c28_381] : memref<8x32xf32, #tpu.memory_space<smem>>
    %756 = vector.broadcast %755 : f32 to vector<8x128xf32>
    %757 = arith.mulf %754, %756 : vector<8x128xf32>
    %758 = arith.addf %732, %757 : vector<8x128xf32>
    %c0_382 = arith.constant 0 : index
    %c29 = arith.constant 29 : index
    %759 = memref.load %arg3[%c0_382, %c29] : memref<8x32xf32, #tpu.memory_space<smem>>
    %760 = vector.broadcast %759 : f32 to vector<8x128xf32>
    %761 = arith.mulf %0, %760 : vector<8x128xf32>
    %c1_383 = arith.constant 1 : index
    %c29_384 = arith.constant 29 : index
    %762 = memref.load %arg3[%c1_383, %c29_384] : memref<8x32xf32, #tpu.memory_space<smem>>
    %763 = vector.broadcast %762 : f32 to vector<8x128xf32>
    %764 = arith.addf %761, %763 : vector<8x128xf32>
    %cst_385 = arith.constant 0.00999999977 : f32
    %765 = vector.broadcast %cst_385 : f32 to vector<8x128xf32>
    %766 = arith.mulf %765, %764 : vector<8x128xf32>
    %767 = arith.maximumf %764, %766 : vector<8x128xf32>
    %c2_386 = arith.constant 2 : index
    %c29_387 = arith.constant 29 : index
    %768 = memref.load %arg3[%c2_386, %c29_387] : memref<8x32xf32, #tpu.memory_space<smem>>
    %769 = vector.broadcast %768 : f32 to vector<8x128xf32>
    %770 = arith.mulf %767, %769 : vector<8x128xf32>
    %771 = arith.addf %745, %770 : vector<8x128xf32>
    %c4_388 = arith.constant 4 : index
    %c29_389 = arith.constant 29 : index
    %772 = memref.load %arg3[%c4_388, %c29_389] : memref<8x32xf32, #tpu.memory_space<smem>>
    %773 = vector.broadcast %772 : f32 to vector<8x128xf32>
    %774 = arith.mulf %0, %773 : vector<8x128xf32>
    %c5_390 = arith.constant 5 : index
    %c29_391 = arith.constant 29 : index
    %775 = memref.load %arg3[%c5_390, %c29_391] : memref<8x32xf32, #tpu.memory_space<smem>>
    %776 = vector.broadcast %775 : f32 to vector<8x128xf32>
    %777 = arith.addf %774, %776 : vector<8x128xf32>
    %cst_392 = arith.constant 0.00999999977 : f32
    %778 = vector.broadcast %cst_392 : f32 to vector<8x128xf32>
    %779 = arith.mulf %778, %777 : vector<8x128xf32>
    %780 = arith.maximumf %777, %779 : vector<8x128xf32>
    %c6_393 = arith.constant 6 : index
    %c29_394 = arith.constant 29 : index
    %781 = memref.load %arg3[%c6_393, %c29_394] : memref<8x32xf32, #tpu.memory_space<smem>>
    %782 = vector.broadcast %781 : f32 to vector<8x128xf32>
    %783 = arith.mulf %780, %782 : vector<8x128xf32>
    %784 = arith.addf %758, %783 : vector<8x128xf32>
    %c0_395 = arith.constant 0 : index
    %c30 = arith.constant 30 : index
    %785 = memref.load %arg3[%c0_395, %c30] : memref<8x32xf32, #tpu.memory_space<smem>>
    %786 = vector.broadcast %785 : f32 to vector<8x128xf32>
    %787 = arith.mulf %0, %786 : vector<8x128xf32>
    %c1_396 = arith.constant 1 : index
    %c30_397 = arith.constant 30 : index
    %788 = memref.load %arg3[%c1_396, %c30_397] : memref<8x32xf32, #tpu.memory_space<smem>>
    %789 = vector.broadcast %788 : f32 to vector<8x128xf32>
    %790 = arith.addf %787, %789 : vector<8x128xf32>
    %cst_398 = arith.constant 0.00999999977 : f32
    %791 = vector.broadcast %cst_398 : f32 to vector<8x128xf32>
    %792 = arith.mulf %791, %790 : vector<8x128xf32>
    %793 = arith.maximumf %790, %792 : vector<8x128xf32>
    %c2_399 = arith.constant 2 : index
    %c30_400 = arith.constant 30 : index
    %794 = memref.load %arg3[%c2_399, %c30_400] : memref<8x32xf32, #tpu.memory_space<smem>>
    %795 = vector.broadcast %794 : f32 to vector<8x128xf32>
    %796 = arith.mulf %793, %795 : vector<8x128xf32>
    %797 = arith.addf %771, %796 : vector<8x128xf32>
    %c4_401 = arith.constant 4 : index
    %c30_402 = arith.constant 30 : index
    %798 = memref.load %arg3[%c4_401, %c30_402] : memref<8x32xf32, #tpu.memory_space<smem>>
    %799 = vector.broadcast %798 : f32 to vector<8x128xf32>
    %800 = arith.mulf %0, %799 : vector<8x128xf32>
    %c5_403 = arith.constant 5 : index
    %c30_404 = arith.constant 30 : index
    %801 = memref.load %arg3[%c5_403, %c30_404] : memref<8x32xf32, #tpu.memory_space<smem>>
    %802 = vector.broadcast %801 : f32 to vector<8x128xf32>
    %803 = arith.addf %800, %802 : vector<8x128xf32>
    %cst_405 = arith.constant 0.00999999977 : f32
    %804 = vector.broadcast %cst_405 : f32 to vector<8x128xf32>
    %805 = arith.mulf %804, %803 : vector<8x128xf32>
    %806 = arith.maximumf %803, %805 : vector<8x128xf32>
    %c6_406 = arith.constant 6 : index
    %c30_407 = arith.constant 30 : index
    %807 = memref.load %arg3[%c6_406, %c30_407] : memref<8x32xf32, #tpu.memory_space<smem>>
    %808 = vector.broadcast %807 : f32 to vector<8x128xf32>
    %809 = arith.mulf %806, %808 : vector<8x128xf32>
    %810 = arith.addf %784, %809 : vector<8x128xf32>
    %c0_408 = arith.constant 0 : index
    %c31 = arith.constant 31 : index
    %811 = memref.load %arg3[%c0_408, %c31] : memref<8x32xf32, #tpu.memory_space<smem>>
    %812 = vector.broadcast %811 : f32 to vector<8x128xf32>
    %813 = arith.mulf %0, %812 : vector<8x128xf32>
    %c1_409 = arith.constant 1 : index
    %c31_410 = arith.constant 31 : index
    %814 = memref.load %arg3[%c1_409, %c31_410] : memref<8x32xf32, #tpu.memory_space<smem>>
    %815 = vector.broadcast %814 : f32 to vector<8x128xf32>
    %816 = arith.addf %813, %815 : vector<8x128xf32>
    %cst_411 = arith.constant 0.00999999977 : f32
    %817 = vector.broadcast %cst_411 : f32 to vector<8x128xf32>
    %818 = arith.mulf %817, %816 : vector<8x128xf32>
    %819 = arith.maximumf %816, %818 : vector<8x128xf32>
    %c2_412 = arith.constant 2 : index
    %c31_413 = arith.constant 31 : index
    %820 = memref.load %arg3[%c2_412, %c31_413] : memref<8x32xf32, #tpu.memory_space<smem>>
    %821 = vector.broadcast %820 : f32 to vector<8x128xf32>
    %822 = arith.mulf %819, %821 : vector<8x128xf32>
    %823 = arith.addf %797, %822 : vector<8x128xf32>
    %c4_414 = arith.constant 4 : index
    %c31_415 = arith.constant 31 : index
    %824 = memref.load %arg3[%c4_414, %c31_415] : memref<8x32xf32, #tpu.memory_space<smem>>
    %825 = vector.broadcast %824 : f32 to vector<8x128xf32>
    %826 = arith.mulf %0, %825 : vector<8x128xf32>
    %c5_416 = arith.constant 5 : index
    %c31_417 = arith.constant 31 : index
    %827 = memref.load %arg3[%c5_416, %c31_417] : memref<8x32xf32, #tpu.memory_space<smem>>
    %828 = vector.broadcast %827 : f32 to vector<8x128xf32>
    %829 = arith.addf %826, %828 : vector<8x128xf32>
    %cst_418 = arith.constant 0.00999999977 : f32
    %830 = vector.broadcast %cst_418 : f32 to vector<8x128xf32>
    %831 = arith.mulf %830, %829 : vector<8x128xf32>
    %832 = arith.maximumf %829, %831 : vector<8x128xf32>
    %c6_419 = arith.constant 6 : index
    %c31_420 = arith.constant 31 : index
    %833 = memref.load %arg3[%c6_419, %c31_420] : memref<8x32xf32, #tpu.memory_space<smem>>
    %834 = vector.broadcast %833 : f32 to vector<8x128xf32>
    %835 = arith.mulf %832, %834 : vector<8x128xf32>
    %836 = arith.addf %810, %835 : vector<8x128xf32>
    %c0_421 = arith.constant 0 : index
    %c0_422 = arith.constant 0 : index
    %837 = vector.load %arg2[%c0_421, %c0_422] : memref<8x128xf32, #tpu.memory_space<vmem>>, vector<8x128xf32>
    %838 = math.exp %823 : vector<8x128xf32>
    %839 = arith.mulf %837, %838 : vector<8x128xf32>
    %840 = arith.addf %839, %836 : vector<8x128xf32>
    %c0_423 = arith.constant 0 : index
    %c0_424 = arith.constant 0 : index
    %841 = vector.load %arg4[%c0_423, %c0_424] : memref<8x128xf32, #tpu.memory_space<vmem>>, vector<8x128xf32>
    tpu.vector_store %arg4[%c0_423, %c0_424], %840 {strides = array<i32>} : memref<8x128xf32, #tpu.memory_space<vmem>>, vector<8x128xf32>,
    %cst_425 = arith.constant 6.28318548 : f32
    %842 = math.log %cst_425 : f32
    %cst_426 = arith.constant 0.000000e+00 : f32
    %843 = arith.subf %cst_426, %842 : f32
    %844 = arith.mulf %0, %0 : vector<8x128xf32>
    %845 = arith.mulf %840, %840 : vector<8x128xf32>
    %846 = arith.addf %844, %845 : vector<8x128xf32>
    %cst_427 = arith.constant 5.000000e-01 : f32
    %847 = vector.broadcast %cst_427 : f32 to vector<8x128xf32>
    %848 = arith.mulf %847, %846 : vector<8x128xf32>
    %849 = vector.broadcast %843 : f32 to vector<8x128xf32>
    %850 = arith.subf %849, %848 : vector<8x128xf32>
    %c0_428 = arith.constant 0 : index
    %c0_429 = arith.constant 0 : index
    %851 = vector.load %arg5[%c0_428, %c0_429] : memref<8x128xf32, #tpu.memory_space<vmem>>, vector<8x128xf32>
    tpu.vector_store %arg5[%c0_428, %c0_429], %850 {strides = array<i32>} : memref<8x128xf32, #tpu.memory_space<vmem>>, vector<8x128xf32>,
    %c0_430 = arith.constant 0 : index
    %c0_431 = arith.constant 0 : index
    %852 = vector.load %arg6[%c0_430, %c0_431] : memref<8x128xf32, #tpu.memory_space<vmem>>, vector<8x128xf32>
    tpu.vector_store %arg6[%c0_430, %c0_431], %823 {strides = array<i32>} : memref<8x128xf32, #tpu.memory_space<vmem>>, vector<8x128xf32>,
    return
  }
  func.func @transform_0(%arg0: i32) -> (i32, i32) {
    %c0_i32 = arith.constant 0 : i32
    %c0_i32_0 = arith.constant 0 : i32
    return %arg0, %c0_i32 : i32, i32
  }
  func.func @transform_1(%arg0: i32) -> (i32, i32) {
    %c0_i32 = arith.constant 0 : i32
    %c0_i32_0 = arith.constant 0 : i32
    return %arg0, %c0_i32 : i32, i32
  }
  func.func @transform_2(%arg0: i32) -> (i32, i32) {
    %c0_i32 = arith.constant 0 : i32
    %c0_i32_0 = arith.constant 0 : i32
    %c0_i32_1 = arith.constant 0 : i32
    return %c0_i32, %c0_i32_0 : i32, i32
  }
  func.func @transform_3(%arg0: i32) -> (i32, i32) {
    %c0_i32 = arith.constant 0 : i32
    %c0_i32_0 = arith.constant 0 : i32
    return %arg0, %c0_i32 : i32, i32
  }
  func.func @transform_4(%arg0: i32) -> (i32, i32) {
    %c0_i32 = arith.constant 0 : i32
    %c0_i32_0 = arith.constant 0 : i32
    return %arg0, %c0_i32 : i32, i32
  }
  func.func @transform_5(%arg0: i32) -> (i32, i32) {
    %c0_i32 = arith.constant 0 : i32
    %c0_i32_0 = arith.constant 0 : i32
    return %arg0, %c0_i32 : i32, i32
  }
}

</mosaic_0001>

<llo_original>
// kernel: tpu_custom_call.1
$region0: #{tpu_custom_call.1}
  #allocation0 [shape = 'u32[]', space=smem, size = 0x4, offset = 0x4, fixed_abs, tag = 'smem constant byte address 0x4 - core index']
  #allocation1 [shape = 'u32[144,128]{1,0:T(1,128)}', space=vmem, size = 0x12000, scoped, tag = 'internal scratch']
  %s0 = inlined_call_operand.hbm [shape: f32[8,128], index: 0, kind: input, shape index: {}]
  %s1 = inlined_call_operand.hbm [shape: f32[8,128], index: 1, kind: input, shape index: {}]
  %s2 = inlined_call_operand.hbm [shape: f32[8,32], index: 2, kind: input, shape index: {}]
  %s3 = inlined_call_operand.hbm [shape: f32[8,128], index: 3, kind: output, shape index: {0}]
  %s4 = inlined_call_operand.hbm [shape: f32[8,128], index: 4, kind: output, shape index: {1}]
  %s5 = inlined_call_operand.hbm [shape: f32[8,128], index: 5, kind: output, shape index: {2}]
  %6 = xla_tuple %s3, %s4, %s5
  %s7 = sld [smem:[#allocation0]]
  $region50: #{tpu_custom_call.1} parent=0
    _
  %s9 = ssub.s32 1, %s7
  %s10 = scalar_select 0, %s9, %s7
  $region1: #{tpu_custom_call.1} parent=0
    #allocation2 [shape = 'u8[4096]{0}', space=vmem, size = 0x1000, scoped, tag = 'input window, operand 0, single buffered']
    #allocation3 [shape = 's32[1]{0}', space=sflag, size = 0x4, scoped, tag = 'scoped memory for tpu_custom_call.1']
    #allocation4 [shape = 's32[1]{0}', space=sflag, size = 0x4, scoped, tag = 'scoped memory for tpu_custom_call.1']
    #allocation5 [shape = 's32[1]{0}', space=sflag, size = 0x4, scoped, tag = 'scoped memory for tpu_custom_call.1']
    #allocation6 [shape = 'u8[4096]{0}', space=vmem, size = 0x1000, scoped, tag = 'input window, operand 1, single buffered']
    #allocation7 [shape = 's32[1]{0}', space=sflag, size = 0x4, scoped, tag = 'scoped memory for tpu_custom_call.1']
    #allocation8 [shape = 'u8[4096]{0}', space=smem, size = 0x1000, scoped, tag = 'input window, operand 2, single buffered']
    #allocation9 [shape = 'u8[4096]{0}', space=vmem, size = 0x1000, scoped, tag = 'output window, operand 0, single buffered']
    #allocation10 [shape = 'u8[4096]{0}', space=vmem, size = 0x1000, scoped, tag = 'output window, operand 1, single buffered']
    #allocation11 [shape = 's32[1]{0}', space=sflag, size = 0x4, scoped, tag = 'scoped memory for tpu_custom_call.1']
    #allocation12 [shape = 'u8[4096]{0}', space=vmem, size = 0x1000, scoped, tag = 'output window, operand 2, single buffered']
    %11 = vsyncpa [#allocation3], 0
    %12 = vsyncpa [#allocation7], 0
    %13 = vsyncpa [#allocation5], 0
    %14 = vsyncpa [#allocation4], 0
    %15 = vsyncpa [#allocation11], 0
    // Predicated region
    $region2: #{tpu_custom_call.1} parent=1 // pred_check
      _
    $region3: #{tpu_custom_call.1} parent=1 // pred_check_branch
      %17 = sbr.rel (0) target = $region5
    $region4: #{tpu_custom_call.1} parent=1 // pred_region
      %s19 = ssub.s32 128, 128
      %20 = vsyncadd [#allocation3], %s19
      %s22 = sshll.u32 [#allocation2], 4
      %s23 = int_to_ptr.vmem [resolvable:$true] %s22
      %25 = dma.hbm_to_vmem [thread:$0]  %s0, 128, %s23, [#allocation3]
    $region5: #{tpu_custom_call.1} parent=1 // pred_fallthru
      _
    // Predicated region
    $region6: #{tpu_custom_call.1} parent=1 // pred_check
      _
    $region7: #{tpu_custom_call.1} parent=1 // pred_check_branch
      %27 = sbr.rel (0) target = $region9
    $region8: #{tpu_custom_call.1} parent=1 // pred_region
      %s29 = ssub.s32 128, 128
      %30 = vsyncadd [#allocation7], %s29
      %s32 = sshll.u32 [#allocation6], 4
      %s33 = int_to_ptr.vmem [resolvable:$true] %s32
      %35 = dma.hbm_to_vmem [thread:$0]  %s1, 128, %s33, [#allocation7]
    $region9: #{tpu_custom_call.1} parent=1 // pred_fallthru
      _
    // Predicated region
    $region10: #{tpu_custom_call.1} parent=1 // pred_check
      _
    $region11: #{tpu_custom_call.1} parent=1 // pred_check_branch
      %37 = sbr.rel (0) target = $region13
    $region12: #{tpu_custom_call.1} parent=1 // pred_region
      %s39 = ssub.s32 128, 128
      %40 = vsyncadd [#allocation5], %s39
      %43 = dma.hbm_to_smem %s2, 128, [#allocation8], [#allocation5]
    $region13: #{tpu_custom_call.1} parent=1 // pred_fallthru
      _
    // Predicated region
    $region14: #{tpu_custom_call.1} parent=1 // pred_check
      _
    $region15: #{tpu_custom_call.1} parent=1 // pred_check_branch
      %45 = sbr.rel (0) target = $region17
    $region16: #{tpu_custom_call.1} parent=1 // pred_region
      %46 = dma.done [#allocation3], 128
    $region17: #{tpu_custom_call.1} parent=1 // pred_fallthru
      _
    // Predicated region
    $region18: #{tpu_custom_call.1} parent=1 // pred_check
      _
    $region19: #{tpu_custom_call.1} parent=1 // pred_check_branch
      %48 = sbr.rel (0) target = $region21
    $region20: #{tpu_custom_call.1} parent=1 // pred_region
      %49 = dma.done [#allocation7], 128
    $region21: #{tpu_custom_call.1} parent=1 // pred_fallthru
      _
    // Predicated region
    $region22: #{tpu_custom_call.1} parent=1 // pred_check
      _
    $region23: #{tpu_custom_call.1} parent=1 // pred_check_branch
      %51 = sbr.rel (0) target = $region25
    $region24: #{tpu_custom_call.1} parent=1 // pred_region
      %52 = dma.done [#allocation5], 128
    $region25: #{tpu_custom_call.1} parent=1 // pred_fallthru
      _
    %53 = sfence
    %v54 = vld [vmem:[#allocation2] sm:$0xff]
    %s55 = sld [smem:[#allocation8 + $0x180]]
    %v56 = vstv %s55
    %s57 = sld [smem:[#allocation8 + $0x380]]
    %v58 = vstv %s57
    %s59 = sld [smem:[#allocation8]]
    %v60 = vstv %s59
    %v61 = vmul.f32 %v54, %v60
    %s62 = sld [smem:[#allocation8 + $0x80]]
    %v63 = vstv %s62
    %v64 = vadd.f32 %v61, %v63
    %v65 = vmul.f32 %v64, 0.01
    %v66 = vmax.f32 %v64, %v65
    %s67 = sld [smem:[#allocation8 + $0x100]]
    %v68 = vstv %s67
    %v69 = vmul.f32 %v66, %v68
    %v70 = vadd.f32 %v56, %v69
    %s71 = sld [smem:[#allocation8 + $0x200]]
    %v72 = vstv %s71
    %v73 = vmul.f32 %v54, %v72
    %s74 = sld [smem:[#allocation8 + $0x280]]
    %v75 = vstv %s74
    %v76 = vadd.f32 %v73, %v75
    %v77 = vmul.f32 %v76, 0.01
    %v78 = vmax.f32 %v76, %v77
    %s79 = sld [smem:[#allocation8 + $0x300]]
    %v80 = vstv %s79
    %v81 = vmul.f32 %v78, %v80
    %v82 = vadd.f32 %v58, %v81
    %s83 = sld [smem:[#allocation8 + $0x1]]
    %v84 = vstv %s83
    %v85 = vmul.f32 %v54, %v84
    %s86 = sld [smem:[#allocation8 + $0x81]]
    %v87 = vstv %s86
    %v88 = vadd.f32 %v85, %v87
    %v89 = vmul.f32 %v88, 0.01
    %v90 = vmax.f32 %v88, %v89
    %s91 = sld [smem:[#allocation8 + $0x101]]
    %v92 = vstv %s91
    %v93 = vmul.f32 %v90, %v92
    %v94 = vadd.f32 %v70, %v93
    %s95 = sld [smem:[#allocation8 + $0x201]]
    %v96 = vstv %s95
    %v97 = vmul.f32 %v54, %v96
    %s98 = sld [smem:[#allocation8 + $0x281]]
    %v99 = vstv %s98
    %v100 = vadd.f32 %v97, %v99
    %v101 = vmul.f32 %v100, 0.01
    %v102 = vmax.f32 %v100, %v101
    %s103 = sld [smem:[#allocation8 + $0x301]]
    %v104 = vstv %s103
    %v105 = vmul.f32 %v102, %v104
    %v106 = vadd.f32 %v82, %v105
    %s107 = sld [smem:[#allocation8 + $0x2]]
    %v108 = vstv %s107
    %v109 = vmul.f32 %v54, %v108
    %s110 = sld [smem:[#allocation8 + $0x82]]
    %v111 = vstv %s110
    %v112 = vadd.f32 %v109, %v111
    %v113 = vmul.f32 %v112, 0.01
    %v114 = vmax.f32 %v112, %v113
    %s115 = sld [smem:[#allocation8 + $0x102]]
    %v116 = vstv %s115
    %v117 = vmul.f32 %v114, %v116
    %v118 = vadd.f32 %v94, %v117
    %s119 = sld [smem:[#allocation8 + $0x202]]
    %v120 = vstv %s119
    %v121 = vmul.f32 %v54, %v120
    %s122 = sld [smem:[#allocation8 + $0x282]]
    %v123 = vstv %s122
    %v124 = vadd.f32 %v121, %v123
    %v125 = vmul.f32 %v124, 0.01
    %v126 = vmax.f32 %v124, %v125
    %s127 = sld [smem:[#allocation8 + $0x302]]
    %v128 = vstv %s127
    %v129 = vmul.f32 %v126, %v128
    %v130 = vadd.f32 %v106, %v129
    %s131 = sld [smem:[#allocation8 + $0x3]]
    %v132 = vstv %s131
    %v133 = vmul.f32 %v54, %v132
    %s134 = sld [smem:[#allocation8 + $0x83]]
    %v135 = vstv %s134
    %v136 = vadd.f32 %v133, %v135
    %v137 = vmul.f32 %v136, 0.01
    %v138 = vmax.f32 %v136, %v137
    %s139 = sld [smem:[#allocation8 + $0x103]]
    %v140 = vstv %s139
    %v141 = vmul.f32 %v138, %v140
    %v142 = vadd.f32 %v118, %v141
    %s143 = sld [smem:[#allocation8 + $0x203]]
    %v144 = vstv %s143
    %v145 = vmul.f32 %v54, %v144
    %s146 = sld [smem:[#allocation8 + $0x283]]
    %v147 = vstv %s146
    %v148 = vadd.f32 %v145, %v147
    %v149 = vmul.f32 %v148, 0.01
    %v150 = vmax.f32 %v148, %v149
    %s151 = sld [smem:[#allocation8 + $0x303]]
    %v152 = vstv %s151
    %v153 = vmul.f32 %v150, %v152
    %v154 = vadd.f32 %v130, %v153
    %s155 = sld [smem:[#allocation8 + $0x4]]
    %v156 = vstv %s155
    %v157 = vmul.f32 %v54, %v156
    %s158 = sld [smem:[#allocation8 + $0x84]]
    %v159 = vstv %s158
    %v160 = vadd.f32 %v157, %v159
    %v161 = vmul.f32 %v160, 0.01
    %v162 = vmax.f32 %v160, %v161
    %s163 = sld [smem:[#allocation8 + $0x104]]
    %v164 = vstv %s163
    %v165 = vmul.f32 %v162, %v164
    %v166 = vadd.f32 %v142, %v165
    %s167 = sld [smem:[#allocation8 + $0x204]]
    %v168 = vstv %s167
    %v169 = vmul.f32 %v54, %v168
    %s170 = sld [smem:[#allocation8 + $0x284]]
    %v171 = vstv %s170
    %v172 = vadd.f32 %v169, %v171
    %v173 = vmul.f32 %v172, 0.01
    %v174 = vmax.f32 %v172, %v173
    %s175 = sld [smem:[#allocation8 + $0x304]]
    %v176 = vstv %s175
    %v177 = vmul.f32 %v174, %v176
    %v178 = vadd.f32 %v154, %v177
    %s179 = sld [smem:[#allocation8 + $0x5]]
    %v180 = vstv %s179
    %v181 = vmul.f32 %v54, %v180
    %s182 = sld [smem:[#allocation8 + $0x85]]
    %v183 = vstv %s182
    %v184 = vadd.f32 %v181, %v183
    %v185 = vmul.f32 %v184, 0.01
    %v186 = vmax.f32 %v184, %v185
    %s187 = sld [smem:[#allocation8 + $0x105]]
    %v188 = vstv %s187
    %v189 = vmul.f32 %v186, %v188
    %v190 = vadd.f32 %v166, %v189
    %s191 = sld [smem:[#allocation8 + $0x205]]
    %v192 = vstv %s191
    %v193 = vmul.f32 %v54, %v192
    %s194 = sld [smem:[#allocation8 + $0x285]]
    %v195 = vstv %s194
    %v196 = vadd.f32 %v193, %v195
    %v197 = vmul.f32 %v196, 0.01
    %v198 = vmax.f32 %v196, %v197
    %s199 = sld [smem:[#allocation8 + $0x305]]
    %v200 = vstv %s199
    %v201 = vmul.f32 %v198, %v200
    %v202 = vadd.f32 %v178, %v201
    %s203 = sld [smem:[#allocation8 + $0x6]]
    %v204 = vstv %s203
    %v205 = vmul.f32 %v54, %v204
    %s206 = sld [smem:[#allocation8 + $0x86]]
    %v207 = vstv %s206
    %v208 = vadd.f32 %v205, %v207
    %v209 = vmul.f32 %v208, 0.01
    %v210 = vmax.f32 %v208, %v209
    %s211 = sld [smem:[#allocation8 + $0x106]]
    %v212 = vstv %s211
    %v213 = vmul.f32 %v210, %v212
    %v214 = vadd.f32 %v190, %v213
    %s215 = sld [smem:[#allocation8 + $0x206]]
    %v216 = vstv %s215
    %v217 = vmul.f32 %v54, %v216
    %s218 = sld [smem:[#allocation8 + $0x286]]
    %v219 = vstv %s218
    %v220 = vadd.f32 %v217, %v219
    %v221 = vmul.f32 %v220, 0.01
    %v222 = vmax.f32 %v220, %v221
    %s223 = sld [smem:[#allocation8 + $0x306]]
    %v224 = vstv %s223
    %v225 = vmul.f32 %v222, %v224
    %v226 = vadd.f32 %v202, %v225
    %s227 = sld [smem:[#allocation8 + $0x7]]
    %v228 = vstv %s227
    %v229 = vmul.f32 %v54, %v228
    %s230 = sld [smem:[#allocation8 + $0x87]]
    %v231 = vstv %s230
    %v232 = vadd.f32 %v229, %v231
    %v233 = vmul.f32 %v232, 0.01
    %v234 = vmax.f32 %v232, %v233
    %s235 = sld [smem:[#allocation8 + $0x107]]
    %v236 = vstv %s235
    %v237 = vmul.f32 %v234, %v236
    %v238 = vadd.f32 %v214, %v237
    %s239 = sld [smem:[#allocation8 + $0x207]]
    %v240 = vstv %s239
    %v241 = vmul.f32 %v54, %v240
    %s242 = sld [smem:[#allocation8 + $0x287]]
    %v243 = vstv %s242
    %v244 = vadd.f32 %v241, %v243
    %v245 = vmul.f32 %v244, 0.01
    %v246 = vmax.f32 %v244, %v245
    %s247 = sld [smem:[#allocation8 + $0x307]]
    %v248 = vstv %s247
    %v249 = vmul.f32 %v246, %v248
    %v250 = vadd.f32 %v226, %v249
    %s251 = sld [smem:[#allocation8 + $0x8]]
    %v252 = vstv %s251
    %v253 = vmul.f32 %v54, %v252
    %s254 = sld [smem:[#allocation8 + $0x88]]
    %v255 = vstv %s254
    %v256 = vadd.f32 %v253, %v255
    %v257 = vmul.f32 %v256, 0.01
    %v258 = vmax.f32 %v256, %v257
    %s259 = sld [smem:[#allocation8 + $0x108]]
    %v260 = vstv %s259
    %v261 = vmul.f32 %v258, %v260
    %v262 = vadd.f32 %v238, %v261
    %s263 = sld [smem:[#allocation8 + $0x208]]
    %v264 = vstv %s263
    %v265 = vmul.f32 %v54, %v264
    %s266 = sld [smem:[#allocation8 + $0x288]]
    %v267 = vstv %s266
    %v268 = vadd.f32 %v265, %v267
    %v269 = vmul.f32 %v268, 0.01
    %v270 = vmax.f32 %v268, %v269
    %s271 = sld [smem:[#allocation8 + $0x308]]
    %v272 = vstv %s271
    %v273 = vmul.f32 %v270, %v272
    %v274 = vadd.f32 %v250, %v273
    %s275 = sld [smem:[#allocation8 + $0x9]]
    %v276 = vstv %s275
    %v277 = vmul.f32 %v54, %v276
    %s278 = sld [smem:[#allocation8 + $0x89]]
    %v279 = vstv %s278
    %v280 = vadd.f32 %v277, %v279
    %v281 = vmul.f32 %v280, 0.01
    %v282 = vmax.f32 %v280, %v281
    %s283 = sld [smem:[#allocation8 + $0x109]]
    %v284 = vstv %s283
    %v285 = vmul.f32 %v282, %v284
    %v286 = vadd.f32 %v262, %v285
    %s287 = sld [smem:[#allocation8 + $0x209]]
    %v288 = vstv %s287
    %v289 = vmul.f32 %v54, %v288
    %s290 = sld [smem:[#allocation8 + $0x289]]
    %v291 = vstv %s290
    %v292 = vadd.f32 %v289, %v291
    %v293 = vmul.f32 %v292, 0.01
    %v294 = vmax.f32 %v292, %v293
    %s295 = sld [smem:[#allocation8 + $0x309]]
    %v296 = vstv %s295
    %v297 = vmul.f32 %v294, %v296
    %v298 = vadd.f32 %v274, %v297
    %s299 = sld [smem:[#allocation8 + $0xa]]
    %v300 = vstv %s299
    %v301 = vmul.f32 %v54, %v300
    %s302 = sld [smem:[#allocation8 + $0x8a]]
    %v303 = vstv %s302
    %v304 = vadd.f32 %v301, %v303
    %v305 = vmul.f32 %v304, 0.01
    %v306 = vmax.f32 %v304, %v305
    %s307 = sld [smem:[#allocation8 + $0x10a]]
    %v308 = vstv %s307
    %v309 = vmul.f32 %v306, %v308
    %v310 = vadd.f32 %v286, %v309
    %s311 = sld [smem:[#allocation8 + $0x20a]]
    %v312 = vstv %s311
    %v313 = vmul.f32 %v54, %v312
    %s314 = sld [smem:[#allocation8 + $0x28a]]
    %v315 = vstv %s314
    %v316 = vadd.f32 %v313, %v315
    %v317 = vmul.f32 %v316, 0.01
    %v318 = vmax.f32 %v316, %v317
    %s319 = sld [smem:[#allocation8 + $0x30a]]
    %v320 = vstv %s319
    %v321 = vmul.f32 %v318, %v320
    %v322 = vadd.f32 %v298, %v321
    %s323 = sld [smem:[#allocation8 + $0xb]]
    %v324 = vstv %s323
    %v325 = vmul.f32 %v54, %v324
    %s326 = sld [smem:[#allocation8 + $0x8b]]
    %v327 = vstv %s326
    %v328 = vadd.f32 %v325, %v327
    %v329 = vmul.f32 %v328, 0.01
    %v330 = vmax.f32 %v328, %v329
    %s331 = sld [smem:[#allocation8 + $0x10b]]
    %v332 = vstv %s331
    %v333 = vmul.f32 %v330, %v332
    %v334 = vadd.f32 %v310, %v333
    %s335 = sld [smem:[#allocation8 + $0x20b]]
    %v336 = vstv %s335
    %v337 = vmul.f32 %v54, %v336
    %s338 = sld [smem:[#allocation8 + $0x28b]]
    %v339 = vstv %s338
    %v340 = vadd.f32 %v337, %v339
    %v341 = vmul.f32 %v340, 0.01
    %v342 = vmax.f32 %v340, %v341
    %s343 = sld [smem:[#allocation8 + $0x30b]]
    %v344 = vstv %s343
    %v345 = vmul.f32 %v342, %v344
    %v346 = vadd.f32 %v322, %v345
    %s347 = sld [smem:[#allocation8 + $0xc]]
    %v348 = vstv %s347
    %v349 = vmul.f32 %v54, %v348
    %s350 = sld [smem:[#allocation8 + $0x8c]]
    %v351 = vstv %s350
    %v352 = vadd.f32 %v349, %v351
    %v353 = vmul.f32 %v352, 0.01
    %v354 = vmax.f32 %v352, %v353
    %s355 = sld [smem:[#allocation8 + $0x10c]]
    %v356 = vstv %s355
    %v357 = vmul.f32 %v354, %v356
    %v358 = vadd.f32 %v334, %v357
    %s359 = sld [smem:[#allocation8 + $0x20c]]
    %v360 = vstv %s359
    %v361 = vmul.f32 %v54, %v360
    %s362 = sld [smem:[#allocation8 + $0x28c]]
    %v363 = vstv %s362
    %v364 = vadd.f32 %v361, %v363
    %v365 = vmul.f32 %v364, 0.01
    %v366 = vmax.f32 %v364, %v365
    %s367 = sld [smem:[#allocation8 + $0x30c]]
    %v368 = vstv %s367
    %v369 = vmul.f32 %v366, %v368
    %v370 = vadd.f32 %v346, %v369
    %s371 = sld [smem:[#allocation8 + $0xd]]
    %v372 = vstv %s371
    %v373 = vmul.f32 %v54, %v372
    %s374 = sld [smem:[#allocation8 + $0x8d]]
    %v375 = vstv %s374
    %v376 = vadd.f32 %v373, %v375
    %v377 = vmul.f32 %v376, 0.01
    %v378 = vmax.f32 %v376, %v377
    %s379 = sld [smem:[#allocation8 + $0x10d]]
    %v380 = vstv %s379
    %v381 = vmul.f32 %v378, %v380
    %v382 = vadd.f32 %v358, %v381
    %s383 = sld [smem:[#allocation8 + $0x20d]]
    %v384 = vstv %s383
    %v385 = vmul.f32 %v54, %v384
    %s386 = sld [smem:[#allocation8 + $0x28d]]
    %v387 = vstv %s386
    %v388 = vadd.f32 %v385, %v387
    %v389 = vmul.f32 %v388, 0.01
    %v390 = vmax.f32 %v388, %v389
    %s391 = sld [smem:[#allocation8 + $0x30d]]
    %v392 = vstv %s391
    %v393 = vmul.f32 %v390, %v392
    %v394 = vadd.f32 %v370, %v393
    %s395 = sld [smem:[#allocation8 + $0xe]]
    %v396 = vstv %s395
    %v397 = vmul.f32 %v54, %v396
    %s398 = sld [smem:[#allocation8 + $0x8e]]
    %v399 = vstv %s398
    %v400 = vadd.f32 %v397, %v399
    %v401 = vmul.f32 %v400, 0.01
    %v402 = vmax.f32 %v400, %v401
    %s403 = sld [smem:[#allocation8 + $0x10e]]
    %v404 = vstv %s403
    %v405 = vmul.f32 %v402, %v404
    %v406 = vadd.f32 %v382, %v405
    %s407 = sld [smem:[#allocation8 + $0x20e]]
    %v408 = vstv %s407
    %v409 = vmul.f32 %v54, %v408
    %s410 = sld [smem:[#allocation8 + $0x28e]]
    %v411 = vstv %s410
    %v412 = vadd.f32 %v409, %v411
    %v413 = vmul.f32 %v412, 0.01
    %v414 = vmax.f32 %v412, %v413
    %s415 = sld [smem:[#allocation8 + $0x30e]]
    %v416 = vstv %s415
    %v417 = vmul.f32 %v414, %v416
    %v418 = vadd.f32 %v394, %v417
    %s419 = sld [smem:[#allocation8 + $0xf]]
    %v420 = vstv %s419
    %v421 = vmul.f32 %v54, %v420
    %s422 = sld [smem:[#allocation8 + $0x8f]]
    %v423 = vstv %s422
    %v424 = vadd.f32 %v421, %v423
    %v425 = vmul.f32 %v424, 0.01
    %v426 = vmax.f32 %v424, %v425
    %s427 = sld [smem:[#allocation8 + $0x10f]]
    %v428 = vstv %s427
    %v429 = vmul.f32 %v426, %v428
    %v430 = vadd.f32 %v406, %v429
    %s431 = sld [smem:[#allocation8 + $0x20f]]
    %v432 = vstv %s431
    %v433 = vmul.f32 %v54, %v432
    %s434 = sld [smem:[#allocation8 + $0x28f]]
    %v435 = vstv %s434
    %v436 = vadd.f32 %v433, %v435
    %v437 = vmul.f32 %v436, 0.01
    %v438 = vmax.f32 %v436, %v437
    %s439 = sld [smem:[#allocation8 + $0x30f]]
    %v440 = vstv %s439
    %v441 = vmul.f32 %v438, %v440
    %v442 = vadd.f32 %v418, %v441
    %s443 = sld [smem:[#allocation8 + $0x10]]
    %v444 = vstv %s443
    %v445 = vmul.f32 %v54, %v444
    %s446 = sld [smem:[#allocation8 + $0x90]]
    %v447 = vstv %s446
    %v448 = vadd.f32 %v445, %v447
    %v449 = vmul.f32 %v448, 0.01
    %v450 = vmax.f32 %v448, %v449
    %s451 = sld [smem:[#allocation8 + $0x110]]
    %v452 = vstv %s451
    %v453 = vmul.f32 %v450, %v452
    %v454 = vadd.f32 %v430, %v453
    %s455 = sld [smem:[#allocation8 + $0x210]]
    %v456 = vstv %s455
    %v457 = vmul.f32 %v54, %v456
    %s458 = sld [smem:[#allocation8 + $0x290]]
    %v459 = vstv %s458
    %v460 = vadd.f32 %v457, %v459
    %v461 = vmul.f32 %v460, 0.01
    %v462 = vmax.f32 %v460, %v461
    %s463 = sld [smem:[#allocation8 + $0x310]]
    %v464 = vstv %s463
    %v465 = vmul.f32 %v462, %v464
    %v466 = vadd.f32 %v442, %v465
    %s467 = sld [smem:[#allocation8 + $0x11]]
    %v468 = vstv %s467
    %v469 = vmul.f32 %v54, %v468
    %s470 = sld [smem:[#allocation8 + $0x91]]
    %v471 = vstv %s470
    %v472 = vadd.f32 %v469, %v471
    %v473 = vmul.f32 %v472, 0.01
    %v474 = vmax.f32 %v472, %v473
    %s475 = sld [smem:[#allocation8 + $0x111]]
    %v476 = vstv %s475
    %v477 = vmul.f32 %v474, %v476
    %v478 = vadd.f32 %v454, %v477
    %s479 = sld [smem:[#allocation8 + $0x211]]
    %v480 = vstv %s479
    %v481 = vmul.f32 %v54, %v480
    %s482 = sld [smem:[#allocation8 + $0x291]]
    %v483 = vstv %s482
    %v484 = vadd.f32 %v481, %v483
    %v485 = vmul.f32 %v484, 0.01
    %v486 = vmax.f32 %v484, %v485
    %s487 = sld [smem:[#allocation8 + $0x311]]
    %v488 = vstv %s487
    %v489 = vmul.f32 %v486, %v488
    %v490 = vadd.f32 %v466, %v489
    %s491 = sld [smem:[#allocation8 + $0x12]]
    %v492 = vstv %s491
    %v493 = vmul.f32 %v54, %v492
    %s494 = sld [smem:[#allocation8 + $0x92]]
    %v495 = vstv %s494
    %v496 = vadd.f32 %v493, %v495
    %v497 = vmul.f32 %v496, 0.01
    %v498 = vmax.f32 %v496, %v497
    %s499 = sld [smem:[#allocation8 + $0x112]]
    %v500 = vstv %s499
    %v501 = vmul.f32 %v498, %v500
    %v502 = vadd.f32 %v478, %v501
    %s503 = sld [smem:[#allocation8 + $0x212]]
    %v504 = vstv %s503
    %v505 = vmul.f32 %v54, %v504
    %s506 = sld [smem:[#allocation8 + $0x292]]
    %v507 = vstv %s506
    %v508 = vadd.f32 %v505, %v507
    %v509 = vmul.f32 %v508, 0.01
    %v510 = vmax.f32 %v508, %v509
    %s511 = sld [smem:[#allocation8 + $0x312]]
    %v512 = vstv %s511
    %v513 = vmul.f32 %v510, %v512
    %v514 = vadd.f32 %v490, %v513
    %s515 = sld [smem:[#allocation8 + $0x13]]
    %v516 = vstv %s515
    %v517 = vmul.f32 %v54, %v516
    %s518 = sld [smem:[#allocation8 + $0x93]]
    %v519 = vstv %s518
    %v520 = vadd.f32 %v517, %v519
    %v521 = vmul.f32 %v520, 0.01
    %v522 = vmax.f32 %v520, %v521
    %s523 = sld [smem:[#allocation8 + $0x113]]
    %v524 = vstv %s523
    %v525 = vmul.f32 %v522, %v524
    %v526 = vadd.f32 %v502, %v525
    %s527 = sld [smem:[#allocation8 + $0x213]]
    %v528 = vstv %s527
    %v529 = vmul.f32 %v54, %v528
    %s530 = sld [smem:[#allocation8 + $0x293]]
    %v531 = vstv %s530
    %v532 = vadd.f32 %v529, %v531
    %v533 = vmul.f32 %v532, 0.01
    %v534 = vmax.f32 %v532, %v533
    %s535 = sld [smem:[#allocation8 + $0x313]]
    %v536 = vstv %s535
    %v537 = vmul.f32 %v534, %v536
    %v538 = vadd.f32 %v514, %v537
    %s539 = sld [smem:[#allocation8 + $0x14]]
    %v540 = vstv %s539
    %v541 = vmul.f32 %v54, %v540
    %s542 = sld [smem:[#allocation8 + $0x94]]
    %v543 = vstv %s542
    %v544 = vadd.f32 %v541, %v543
    %v545 = vmul.f32 %v544, 0.01
    %v546 = vmax.f32 %v544, %v545
    %s547 = sld [smem:[#allocation8 + $0x114]]
    %v548 = vstv %s547
    %v549 = vmul.f32 %v546, %v548
    %v550 = vadd.f32 %v526, %v549
    %s551 = sld [smem:[#allocation8 + $0x214]]
    %v552 = vstv %s551
    %v553 = vmul.f32 %v54, %v552
    %s554 = sld [smem:[#allocation8 + $0x294]]
    %v555 = vstv %s554
    %v556 = vadd.f32 %v553, %v555
    %v557 = vmul.f32 %v556, 0.01
    %v558 = vmax.f32 %v556, %v557
    %s559 = sld [smem:[#allocation8 + $0x314]]
    %v560 = vstv %s559
    %v561 = vmul.f32 %v558, %v560
    %v562 = vadd.f32 %v538, %v561
    %s563 = sld [smem:[#allocation8 + $0x15]]
    %v564 = vstv %s563
    %v565 = vmul.f32 %v54, %v564
    %s566 = sld [smem:[#allocation8 + $0x95]]
    %v567 = vstv %s566
    %v568 = vadd.f32 %v565, %v567
    %v569 = vmul.f32 %v568, 0.01
    %v570 = vmax.f32 %v568, %v569
    %s571 = sld [smem:[#allocation8 + $0x115]]
    %v572 = vstv %s571
    %v573 = vmul.f32 %v570, %v572
    %v574 = vadd.f32 %v550, %v573
    %s575 = sld [smem:[#allocation8 + $0x215]]
    %v576 = vstv %s575
    %v577 = vmul.f32 %v54, %v576
    %s578 = sld [smem:[#allocation8 + $0x295]]
    %v579 = vstv %s578
    %v580 = vadd.f32 %v577, %v579
    %v581 = vmul.f32 %v580, 0.01
    %v582 = vmax.f32 %v580, %v581
    %s583 = sld [smem:[#allocation8 + $0x315]]
    %v584 = vstv %s583
    %v585 = vmul.f32 %v582, %v584
    %v586 = vadd.f32 %v562, %v585
    %s587 = sld [smem:[#allocation8 + $0x16]]
    %v588 = vstv %s587
    %v589 = vmul.f32 %v54, %v588
    %s590 = sld [smem:[#allocation8 + $0x96]]
    %v591 = vstv %s590
    %v592 = vadd.f32 %v589, %v591
    %v593 = vmul.f32 %v592, 0.01
    %v594 = vmax.f32 %v592, %v593
    %s595 = sld [smem:[#allocation8 + $0x116]]
    %v596 = vstv %s595
    %v597 = vmul.f32 %v594, %v596
    %v598 = vadd.f32 %v574, %v597
    %s599 = sld [smem:[#allocation8 + $0x216]]
    %v600 = vstv %s599
    %v601 = vmul.f32 %v54, %v600
    %s602 = sld [smem:[#allocation8 + $0x296]]
    %v603 = vstv %s602
    %v604 = vadd.f32 %v601, %v603
    %v605 = vmul.f32 %v604, 0.01
    %v606 = vmax.f32 %v604, %v605
    %s607 = sld [smem:[#allocation8 + $0x316]]
    %v608 = vstv %s607
    %v609 = vmul.f32 %v606, %v608
    %v610 = vadd.f32 %v586, %v609
    %s611 = sld [smem:[#allocation8 + $0x17]]
    %v612 = vstv %s611
    %v613 = vmul.f32 %v54, %v612
    %s614 = sld [smem:[#allocation8 + $0x97]]
    %v615 = vstv %s614
    %v616 = vadd.f32 %v613, %v615
    %v617 = vmul.f32 %v616, 0.01
    %v618 = vmax.f32 %v616, %v617
    %s619 = sld [smem:[#allocation8 + $0x117]]
    %v620 = vstv %s619
    %v621 = vmul.f32 %v618, %v620
    %v622 = vadd.f32 %v598, %v621
    %s623 = sld [smem:[#allocation8 + $0x217]]
    %v624 = vstv %s623
    %v625 = vmul.f32 %v54, %v624
    %s626 = sld [smem:[#allocation8 + $0x297]]
    %v627 = vstv %s626
    %v628 = vadd.f32 %v625, %v627
    %v629 = vmul.f32 %v628, 0.01
    %v630 = vmax.f32 %v628, %v629
    %s631 = sld [smem:[#allocation8 + $0x317]]
    %v632 = vstv %s631
    %v633 = vmul.f32 %v630, %v632
    %v634 = vadd.f32 %v610, %v633
    %s635 = sld [smem:[#allocation8 + $0x18]]
    %v636 = vstv %s635
    %v637 = vmul.f32 %v54, %v636
    %s638 = sld [smem:[#allocation8 + $0x98]]
    %v639 = vstv %s638
    %v640 = vadd.f32 %v637, %v639
    %v641 = vmul.f32 %v640, 0.01
    %v642 = vmax.f32 %v640, %v641
    %s643 = sld [smem:[#allocation8 + $0x118]]
    %v644 = vstv %s643
    %v645 = vmul.f32 %v642, %v644
    %v646 = vadd.f32 %v622, %v645
    %s647 = sld [smem:[#allocation8 + $0x218]]
    %v648 = vstv %s647
    %v649 = vmul.f32 %v54, %v648
    %s650 = sld [smem:[#allocation8 + $0x298]]
    %v651 = vstv %s650
    %v652 = vadd.f32 %v649, %v651
    %v653 = vmul.f32 %v652, 0.01
    %v654 = vmax.f32 %v652, %v653
    %s655 = sld [smem:[#allocation8 + $0x318]]
    %v656 = vstv %s655
    %v657 = vmul.f32 %v654, %v656
    %v658 = vadd.f32 %v634, %v657
    %s659 = sld [smem:[#allocation8 + $0x19]]
    %v660 = vstv %s659
    %v661 = vmul.f32 %v54, %v660
    %s662 = sld [smem:[#allocation8 + $0x99]]
    %v663 = vstv %s662
    %v664 = vadd.f32 %v661, %v663
    %v665 = vmul.f32 %v664, 0.01
    %v666 = vmax.f32 %v664, %v665
    %s667 = sld [smem:[#allocation8 + $0x119]]
    %v668 = vstv %s667
    %v669 = vmul.f32 %v666, %v668
    %v670 = vadd.f32 %v646, %v669
    %s671 = sld [smem:[#allocation8 + $0x219]]
    %v672 = vstv %s671
    %v673 = vmul.f32 %v54, %v672
    %s674 = sld [smem:[#allocation8 + $0x299]]
    %v675 = vstv %s674
    %v676 = vadd.f32 %v673, %v675
    %v677 = vmul.f32 %v676, 0.01
    %v678 = vmax.f32 %v676, %v677
    %s679 = sld [smem:[#allocation8 + $0x319]]
    %v680 = vstv %s679
    %v681 = vmul.f32 %v678, %v680
    %v682 = vadd.f32 %v658, %v681
    %s683 = sld [smem:[#allocation8 + $0x1a]]
    %v684 = vstv %s683
    %v685 = vmul.f32 %v54, %v684
    %s686 = sld [smem:[#allocation8 + $0x9a]]
    %v687 = vstv %s686
    %v688 = vadd.f32 %v685, %v687
    %v689 = vmul.f32 %v688, 0.01
    %v690 = vmax.f32 %v688, %v689
    %s691 = sld [smem:[#allocation8 + $0x11a]]
    %v692 = vstv %s691
    %v693 = vmul.f32 %v690, %v692
    %v694 = vadd.f32 %v670, %v693
    %s695 = sld [smem:[#allocation8 + $0x21a]]
    %v696 = vstv %s695
    %v697 = vmul.f32 %v54, %v696
    %s698 = sld [smem:[#allocation8 + $0x29a]]
    %v699 = vstv %s698
    %v700 = vadd.f32 %v697, %v699
    %v701 = vmul.f32 %v700, 0.01
    %v702 = vmax.f32 %v700, %v701
    %s703 = sld [smem:[#allocation8 + $0x31a]]
    %v704 = vstv %s703
    %v705 = vmul.f32 %v702, %v704
    %v706 = vadd.f32 %v682, %v705
    %s707 = sld [smem:[#allocation8 + $0x1b]]
    %v708 = vstv %s707
    %v709 = vmul.f32 %v54, %v708
    %s710 = sld [smem:[#allocation8 + $0x9b]]
    %v711 = vstv %s710
    %v712 = vadd.f32 %v709, %v711
    %v713 = vmul.f32 %v712, 0.01
    %v714 = vmax.f32 %v712, %v713
    %s715 = sld [smem:[#allocation8 + $0x11b]]
    %v716 = vstv %s715
    %v717 = vmul.f32 %v714, %v716
    %v718 = vadd.f32 %v694, %v717
    %s719 = sld [smem:[#allocation8 + $0x21b]]
    %v720 = vstv %s719
    %v721 = vmul.f32 %v54, %v720
    %s722 = sld [smem:[#allocation8 + $0x29b]]
    %v723 = vstv %s722
    %v724 = vadd.f32 %v721, %v723
    %v725 = vmul.f32 %v724, 0.01
    %v726 = vmax.f32 %v724, %v725
    %s727 = sld [smem:[#allocation8 + $0x31b]]
    %v728 = vstv %s727
    %v729 = vmul.f32 %v726, %v728
    %v730 = vadd.f32 %v706, %v729
    %s731 = sld [smem:[#allocation8 + $0x1c]]
    %v732 = vstv %s731
    %v733 = vmul.f32 %v54, %v732
    %s734 = sld [smem:[#allocation8 + $0x9c]]
    %v735 = vstv %s734
    %v736 = vadd.f32 %v733, %v735
    %v737 = vmul.f32 %v736, 0.01
    %v738 = vmax.f32 %v736, %v737
    %s739 = sld [smem:[#allocation8 + $0x11c]]
    %v740 = vstv %s739
    %v741 = vmul.f32 %v738, %v740
    %v742 = vadd.f32 %v718, %v741
    %s743 = sld [smem:[#allocation8 + $0x21c]]
    %v744 = vstv %s743
    %v745 = vmul.f32 %v54, %v744
    %s746 = sld [smem:[#allocation8 + $0x29c]]
    %v747 = vstv %s746
    %v748 = vadd.f32 %v745, %v747
    %v749 = vmul.f32 %v748, 0.01
    %v750 = vmax.f32 %v748, %v749
    %s751 = sld [smem:[#allocation8 + $0x31c]]
    %v752 = vstv %s751
    %v753 = vmul.f32 %v750, %v752
    %v754 = vadd.f32 %v730, %v753
    %s755 = sld [smem:[#allocation8 + $0x1d]]
    %v756 = vstv %s755
    %v757 = vmul.f32 %v54, %v756
    %s758 = sld [smem:[#allocation8 + $0x9d]]
    %v759 = vstv %s758
    %v760 = vadd.f32 %v757, %v759
    %v761 = vmul.f32 %v760, 0.01
    %v762 = vmax.f32 %v760, %v761
    %s763 = sld [smem:[#allocation8 + $0x11d]]
    %v764 = vstv %s763
    %v765 = vmul.f32 %v762, %v764
    %v766 = vadd.f32 %v742, %v765
    %s767 = sld [smem:[#allocation8 + $0x21d]]
    %v768 = vstv %s767
    %v769 = vmul.f32 %v54, %v768
    %s770 = sld [smem:[#allocation8 + $0x29d]]
    %v771 = vstv %s770
    %v772 = vadd.f32 %v769, %v771
    %v773 = vmul.f32 %v772, 0.01
    %v774 = vmax.f32 %v772, %v773
    %s775 = sld [smem:[#allocation8 + $0x31d]]
    %v776 = vstv %s775
    %v777 = vmul.f32 %v774, %v776
    %v778 = vadd.f32 %v754, %v777
    %s779 = sld [smem:[#allocation8 + $0x1e]]
    %v780 = vstv %s779
    %v781 = vmul.f32 %v54, %v780
    %s782 = sld [smem:[#allocation8 + $0x9e]]
    %v783 = vstv %s782
    %v784 = vadd.f32 %v781, %v783
    %v785 = vmul.f32 %v784, 0.01
    %v786 = vmax.f32 %v784, %v785
    %s787 = sld [smem:[#allocation8 + $0x11e]]
    %v788 = vstv %s787
    %v789 = vmul.f32 %v786, %v788
    %v790 = vadd.f32 %v766, %v789
    %s791 = sld [smem:[#allocation8 + $0x21e]]
    %v792 = vstv %s791
    %v793 = vmul.f32 %v54, %v792
    %s794 = sld [smem:[#allocation8 + $0x29e]]
    %v795 = vstv %s794
    %v796 = vadd.f32 %v793, %v795
    %v797 = vmul.f32 %v796, 0.01
    %v798 = vmax.f32 %v796, %v797
    %s799 = sld [smem:[#allocation8 + $0x31e]]
    %v800 = vstv %s799
    %v801 = vmul.f32 %v798, %v800
    %v802 = vadd.f32 %v778, %v801
    %s803 = sld [smem:[#allocation8 + $0x1f]]
    %v804 = vstv %s803
    %v805 = vmul.f32 %v54, %v804
    %s806 = sld [smem:[#allocation8 + $0x9f]]
    %v807 = vstv %s806
    %v808 = vadd.f32 %v805, %v807
    %v809 = vmul.f32 %v808, 0.01
    %v810 = vmax.f32 %v808, %v809
    %s811 = sld [smem:[#allocation8 + $0x11f]]
    %v812 = vstv %s811
    %v813 = vmul.f32 %v810, %v812
    %v814 = vadd.f32 %v790, %v813
    %s815 = sld [smem:[#allocation8 + $0x21f]]
    %v816 = vstv %s815
    %v817 = vmul.f32 %v54, %v816
    %s818 = sld [smem:[#allocation8 + $0x29f]]
    %v819 = vstv %s818
    %v820 = vadd.f32 %v817, %v819
    %v821 = vmul.f32 %v820, 0.01
    %v822 = vmax.f32 %v820, %v821
    %s823 = sld [smem:[#allocation8 + $0x31f]]
    %v824 = vstv %s823
    %v825 = vmul.f32 %v822, %v824
    %v826 = vadd.f32 %v802, %v825
    %v827 = vld [vmem:[#allocation6] sm:$0xff]
    %v828 = vmul.f32 %v814, 1.442695
    %v829 = vpow.pop %v828
    %v830 = vmul.f32 %v827, %v829
    %v831 = vadd.f32 %v830, %v826
    %832 = vst [vmem:[#allocation9] sm:$0xff] %v831
    %v833 = vmul.f32 %v54, %v54
    %v834 = vmul.f32 %v831, %v831
    %v835 = vadd.f32 %v833, %v834
    %v836 = vmul.f32 %v835, 0.5
    %v837 = vsub.f32 -1.837877, %v836
    %838 = vst [vmem:[#allocation10] sm:$0xff] %v837
    %839 = vst [vmem:[#allocation12] sm:$0xff] %v814
    // Predicated region
    $region26: #{tpu_custom_call.1} parent=1 // pred_check
      _
    $region27: #{tpu_custom_call.1} parent=1 // pred_check_branch
      %841 = sbr.rel (0) target = $region29
    $region28: #{tpu_custom_call.1} parent=1 // pred_region
      %s843 = ssub.s32 128, 128
      %844 = vsyncadd [#allocation4], %s843
      %s846 = sshll.u32 [#allocation9], 4
      %s847 = int_to_ptr.vmem [resolvable:$true] %s846
      %849 = dma.vmem_to_hbm [thread:$0]  %s847, 128, %s3, [#allocation4]
    $region29: #{tpu_custom_call.1} parent=1 // pred_fallthru
      _
    // Predicated region
    $region30: #{tpu_custom_call.1} parent=1 // pred_check
      _
    $region31: #{tpu_custom_call.1} parent=1 // pred_check_branch
      %851 = sbr.rel (0) target = $region33
    $region32: #{tpu_custom_call.1} parent=1 // pred_region
      %s853 = ssub.s32 128, 128
      %854 = vsyncadd [#allocation11], %s853
      %s856 = sshll.u32 [#allocation10], 4
      %s857 = int_to_ptr.vmem [resolvable:$true] %s856
      %859 = dma.vmem_to_hbm [thread:$0]  %s857, 128, %s4, [#allocation11]
    $region33: #{tpu_custom_call.1} parent=1 // pred_fallthru
      _
    // Predicated region
    $region34: #{tpu_custom_call.1} parent=1 // pred_check
      _
    $region35: #{tpu_custom_call.1} parent=1 // pred_check_branch
      %861 = sbr.rel (0) target = $region37
    $region36: #{tpu_custom_call.1} parent=1 // pred_region
      %s863 = ssub.s32 128, 128
      %864 = vsyncadd [#allocation11], %s863
      %s866 = sshll.u32 [#allocation12], 4
      %s867 = int_to_ptr.vmem [resolvable:$true] %s866
      %869 = dma.vmem_to_hbm [thread:$0]  %s867, 128, %s5, [#allocation11]
    $region37: #{tpu_custom_call.1} parent=1 // pred_fallthru
      _
    // Predicated region
    $region38: #{tpu_custom_call.1} parent=1 // pred_check
      _
    $region39: #{tpu_custom_call.1} parent=1 // pred_check_branch
      %871 = sbr.rel (0) target = $region41
    $region40: #{tpu_custom_call.1} parent=1 // pred_region
      %872 = dma.done [#allocation4], 128
    $region41: #{tpu_custom_call.1} parent=1 // pred_fallthru
      _
    // Predicated region
    $region42: #{tpu_custom_call.1} parent=1 // pred_check
      _
    $region43: #{tpu_custom_call.1} parent=1 // pred_check_branch
      %874 = sbr.rel (0) target = $region45
    $region44: #{tpu_custom_call.1} parent=1 // pred_region
      %875 = dma.done [#allocation11], 128
    $region45: #{tpu_custom_call.1} parent=1 // pred_fallthru
      _
    // Predicated region
    $region46: #{tpu_custom_call.1} parent=1 // pred_check
      _
    $region47: #{tpu_custom_call.1} parent=1 // pred_check_branch
      %877 = sbr.rel (0) target = $region49
    $region48: #{tpu_custom_call.1} parent=1 // pred_region
      %878 = dma.done [#allocation11], 128
    $region49: #{tpu_custom_call.1} parent=1 // pred_fallthru
      _
    %879 = vsyncpa [#allocation3], 1
    %880 = vsyncpa [#allocation7], 1
    %881 = vsyncpa [#allocation4], 1
    %882 = vsyncpa [#allocation11], 1
    %883 = vsyncpa [#allocation5], 1

</llo_original>
